<compile_context>
chip_gen: v6e
topology: v6e:2x2x1
jax: 0.10.0
libtpu: 0.0.40
codegen_flags: <defaults>
</compile_context>

<pallas_src>
import numpy as np
import jax
import jax.numpy as jnp
from jax import lax
from jax.experimental import pallas as pl
from jax.experimental.pallas import tpu as pltpu

# ----------------------------------------------------------------------------
# Config (mirrors the `args` object the PyTorch module is built from)
# ----------------------------------------------------------------------------
VOCAB_SIZE = 50
DIM_EMBEDDING = 16
HIDDEN_SIZE = 32
NUM_CLASS = 4
BATCH = 2
SEQ_LEN = 8


# ----------------------------------------------------------------------------
# Fused kernel: LSTM recurrence + quirky soft-attention + classifier
# ----------------------------------------------------------------------------
def rnn_attention_kernel(x_ref, len_ref, wih_ref, whh_ref, bias_ref,
                         watt_ref, wlin_ref, blin_ref,
                         logits_ref, emb_ref):
    """
    x_ref:    (T*B, E)  embedded inputs, flat row p = t*B + b (time-major)
    len_ref:  (B,)      int32 valid lengths, SMEM
    wih_ref:  (E, 4H)   fused input weights, gate order i,f,g,o along lanes
    whh_ref:  (H, 4H)   fused recurrent weights
    bias_ref: (1, 4H)   fused bias (b_ih + b_hh)
    watt_ref: (1, H)    self.atten weight row; its bias is a constant offset on
                        every score and cancels under softmax, so it is dropped
    wlin_ref: (H, C), blin_ref: (1, C)
    logits_ref: (B, C), emb_ref: (B, H)   outputs
    """
    TB, _ = x_ref.shape
    H = whh_ref.shape[0]
    B = len_ref.shape[0]
    T = TB // B

    # ---- loop-invariant operands, hoisted ------------------------------------
    whh = whh_ref[...]                                   # (H, 4H)
    watt = watt_ref[...]                                 # (1, H)

    # Input projection for ALL timesteps in one MXU op (bias folded in); the
    # recurrence below carries only one matmul per step.
    gates_x = (jnp.dot(x_ref[...], wih_ref[...],
                       preferred_element_type=jnp.float32)
               + bias_ref[...])                          # (T*B, 4H)

    # (B, 1) length vector built from SMEM scalars (replaces the old (T,B,1)
    # f32 mask input and its per-step broadcast).
    row = lax.broadcasted_iota(jnp.int32, (B, 1), 0)
    lens = jnp.zeros((B, 1), jnp.int32)
    for b in range(B):
        lens = jnp.where(row == b, len_ref[b], lens)

    def sig(v):  # logistic via tanh: single EUP op, no divide on the chain
        return 0.5 * jnp.tanh(0.5 * v) + 0.5

    # module's h0 / c0 parameters are nn.Parameter(torch.zeros(...))
    h = jnp.zeros((B, H), jnp.float32)
    c = jnp.zeros((B, H), jnp.float32)
    h_masked = []                                        # register-resident

    # Fully unrolled recurrence (T static & small): one (B,H)@(H,4H) MXU op,
    # 5 EUP nonlinearities and a handful of VPU ops per step.
    for t in range(T):
        gates = (jnp.dot(h, whh, preferred_element_type=jnp.float32)
                 + gates_x[t * B:(t + 1) * B, :])        # (B, 4H)
        i = sig(gates[:, 0 * H:1 * H])
        f = sig(gates[:, 1 * H:2 * H])
        g = jnp.tanh(gates[:, 2 * H:3 * H])
        o = sig(gates[:, 3 * H:4 * H])
        c = f * c + i * g
        h = o * jnp.tanh(c)
        # pad_packed_sequence semantics: rows with t >= length[b] are zero.
        h_masked.append(jnp.where(lens > t, h, 0.0))     # (B, H)

    # ---- attention scores (post-loop; VPU multiply + lane reduce, no MXU) ----
    sc = [jnp.sum(hm * watt, axis=1, keepdims=True) for hm in h_masked]
    scores_col = jnp.concatenate(sc, axis=0)             # (T*B, 1), row p=t*B+b
    # This flat column IS torch's `scores` vector (t-major).  The PyTorch quirk
    # scores.reshape([-1, seq_len]) + softmax(dim=1) is a softmax over the B
    # contiguous length-T slices of this column.
    alphas = []                                          # alphas[b]: (T, 1)
    for b in range(B):
        s_b = scores_col[b * T:(b + 1) * T, :]           # (T, 1)
        m_b = jnp.max(s_b, keepdims=True)                # (1, 1)
        e_b = jnp.exp(s_b - m_b)
        z_b = jnp.sum(e_b, keepdims=True)                # (1, 1)
        alphas.append(e_b / z_b)                         # exact divide

    # attn[b, :] = sum_t alphas[b][t] * h_masked[t][b, :]   (reference formula
    # with the quirk baked into which score each alpha came from)
    attn_rows = []
    for b in range(B):
        acc = jnp.zeros((1, H), jnp.float32)
        for t in range(T):
            acc = acc + alphas[b][t:t + 1, :] * h_masked[t][b:b + 1, :]
        attn_rows.append(acc)
    attn = jnp.concatenate(attn_rows, axis=0)            # (B, H)

    emb_ref[...] = attn
    logits_ref[...] = (jnp.dot(attn, wlin_ref[...],
                               preferred_element_type=jnp.float32)
                       + blin_ref[...])                  # (B, C)


# ----------------------------------------------------------------------------
# Wrapper (glue: lengths, sort, embedding gather)
# ----------------------------------------------------------------------------
def _vmem():
    return pl.BlockSpec(memory_space=pltpu.MemorySpace.VMEM)


def _smem():
    return pl.BlockSpec(memory_space=pltpu.MemorySpace.SMEM)


@jax.jit
def rnn_attention_forward(x_tokens, params):
    B, T = x_tokens.shape
    H, C = HIDDEN_SIZE, NUM_CLASS

    # lengths = seq_len - #zeros ; sort batch by length descending (torch.sort)
    lengths = T - jnp.sum(x_tokens == 0, axis=1)
    order = jnp.argsort(-lengths)                        # stable, descending
    x_sorted = x_tokens[order]
    lengths = lengths[order].astype(jnp.int32)

    emb = jnp.take(params["embedding"], x_sorted, axis=0)            # (B, T, E)
    x_tbe = jnp.transpose(emb, (1, 0, 2)).astype(jnp.float32)        # (T, B, E)
    x_flat = x_tbe.reshape(T * B, DIM_EMBEDDING)                     # p = t*B+b

    logits, attn_emb = pl.pallas_call(
        rnn_attention_kernel,
        out_shape=(jax.ShapeDtypeStruct((B, C), jnp.float32),
                   jax.ShapeDtypeStruct((B, H), jnp.float32)),
        in_specs=[_vmem(),   # x_flat
                  _smem(),   # lengths
                  _vmem(),   # w_ih
                  _vmem(),   # w_hh
                  _vmem(),   # b_gate
                  _vmem(),   # w_att (row)
                  _vmem(),   # w_lin
                  _vmem()],  # b_lin
        out_specs=(_vmem(), _vmem()),
    )(x_flat, lengths, params["w_ih"], params["w_hh"], params["b_gate"],
      params["w_att"], params["w_lin"], params["b_lin"])

    return logits, attn_emb


# ----------------------------------------------------------------------------
# Deterministic parameter initialization (shapes match nn.Module __init__)
# ----------------------------------------------------------------------------
def _uniform(key, shape, bound):
    return jax.random.uniform(key, shape, jnp.float32, -bound, bound)


def init_params(key):
    V, E, H, C = VOCAB_SIZE, DIM_EMBEDDING, HIDDEN_SIZE, NUM_CLASS
    k = jax.random.split(key, 9)
    bound = 1.0 / np.sqrt(H)

    embedding = jax.random.normal(k[0], (V, E), jnp.float32)  # nn.Embedding ~N(0,1)

    # torch nn.LSTM layout: weight_ih (4H, E), weight_hh (4H, H), gates i,f,g,o
    # stacked along rows.  Transposing gives the fused (E,4H)/(H,4H) layout the
    # kernel uses (single MXU matmul, gate blocks along lanes).
    w_ih_full = _uniform(k[1], (4 * H, E), bound)
    w_hh_full = _uniform(k[2], (4 * H, H), bound)
    b_ih = _uniform(k[3], (4 * H,), bound)
    b_hh = _uniform(k[4], (4 * H,), bound)

    w_ih = w_ih_full.T                                 # (E, 4H)
    w_hh = w_hh_full.T                                 # (H, 4H)
    b_gate = (b_ih + b_hh).reshape(1, 4 * H)           # (1, 4H)

    w_att = _uniform(k[5], (1, H), bound)              # self.atten: Linear(H, 1)
    b_att = _uniform(k[6], (1,), bound).reshape(1, 1)  # reference only (softmax no-op)
    w_lin = _uniform(k[7], (C, H), bound).T            # self.linear: Linear(H, C)
    b_lin = _uniform(k[8], (C,), bound).reshape(1, C)

    return dict(embedding=embedding, w_ih=w_ih, w_hh=w_hh, b_gate=b_gate,
                w_att=w_att, b_att=b_att, w_lin=w_lin, b_lin=b_lin)


# ----------------------------------------------------------------------------
# Pure numpy reference (same math as the PyTorch forward, incl. reshape quirk)
# ----------------------------------------------------------------------------
def reference_forward(x_tokens, params):
    x = np.asarray(x_tokens)
    B, T = x.shape
    H = HIDDEN_SIZE
    emb_tbl = np.asarray(params["embedding"])
    w_ih = np.asarray(params["w_ih"]); w_hh = np.asarray(params["w_hh"])
    b_g = np.asarray(params["b_gate"])
    w_att = np.asarray(params["w_att"]); b_att = np.asarray(params["b_att"])
    w_lin = np.asarray(params["w_lin"]); b_lin = np.asarray(params["b_lin"])

    lengths = T - (x == 0).sum(axis=1)
    order = np.argsort(-lengths, kind="stable")
    x = x[order]; lengths = lengths[order]

    xe = np.transpose(emb_tbl[x], (1, 0, 2))                  # (T, B, E)

    def sig(v):
        return 1.0 / (1.0 + np.exp(-v))

    h = np.zeros((B, H), np.float32); c = np.zeros((B, H), np.float32)
    outs = np.zeros((T, B, H), np.float32)
    for t in range(T):
        gates = xe[t] @ w_ih + h @ w_hh + b_g                 # (B, 4H)
        i = sig(gates[:, 0:H]); f = sig(gates[:, H:2 * H])
        g = np.tanh(gates[:, 2 * H:3 * H]); o = sig(gates[:, 3 * H:4 * H])
        c = f * c + i * g
        h = o * np.tanh(c)
        outs[t] = h * (t < lengths).astype(np.float32)[:, None]

    scores = outs.reshape(-1, H) @ w_att.T + b_att            # (T*B, 1)
    scores = scores.reshape(B, T)                             # PyTorch reshape quirk
    scores = scores - scores.max(axis=1, keepdims=True)
    alphas = np.exp(scores); alphas /= alphas.sum(axis=1, keepdims=True)
    state = np.transpose(outs, (1, 0, 2))                     # (B, T, H)
    attn = (state * alphas[:, :, None]).sum(axis=1)           # (B, H)
    logits = attn @ w_lin + b_lin
    return logits.astype(np.float32), attn.astype(np.float32)


# ----------------------------------------------------------------------------
if __name__ == "__main__":
    key = jax.random.PRNGKey(0)
    pkey, xkey = jax.random.split(key)
    params = init_params(pkey)

    # token ids in [1, V); token 0 is padding (trailing), distinct lengths
    tokens = jax.random.randint(xkey, (BATCH, SEQ_LEN), 1, VOCAB_SIZE, dtype=jnp.int32)
    valid_lens = jnp.array([6, 8], dtype=jnp.int32)
    pad_mask = jnp.arange(SEQ_LEN)[None, :] < valid_lens[:, None]
    tokens = jnp.where(pad_mask, tokens, 0)

    logits, embedding = rnn_attention_forward(tokens, params)
    jax.block_until_ready((logits, embedding))

    ref_logits, ref_emb = reference_forward(tokens, params)
    np.testing.assert_allclose(np.asarray(logits), ref_logits, rtol=2e-3, atol=2e-3)
    np.testing.assert_allclose(np.asarray(embedding), ref_emb, rtol=2e-3, atol=2e-3)

    print("KERNEL_OK")
</pallas_src>

<mosaic_0001>
module attributes {stable_mosaic.version = 11 : i64} {
  func.func @rnn_attention_kernel(%arg0: memref<16x16xf32, #tpu.memory_space<vmem>>, %arg1: memref<2xi32, #tpu.memory_space<smem>>, %arg2: memref<16x128xf32, #tpu.memory_space<vmem>>, %arg3: memref<32x128xf32, #tpu.memory_space<vmem>>, %arg4: memref<1x128xf32, #tpu.memory_space<vmem>>, %arg5: memref<1x32xf32, #tpu.memory_space<vmem>>, %arg6: memref<32x4xf32, #tpu.memory_space<vmem>>, %arg7: memref<1x4xf32, #tpu.memory_space<vmem>>, %arg8: memref<2x4xf32, #tpu.memory_space<vmem>>, %arg9: memref<2x32xf32, #tpu.memory_space<vmem>>) attributes {dimension_semantics = [], scalar_prefetch = 0 : i64, scratch_operands = 0 : i64, tpu.core_type = #tpu.core_type<tc>} {
    %c0 = arith.constant 0 : index
    %c0_0 = arith.constant 0 : index
    %0 = vector.load %arg3[%c0, %c0_0] : memref<32x128xf32, #tpu.memory_space<vmem>>, vector<32x128xf32>
    %c0_1 = arith.constant 0 : index
    %c0_2 = arith.constant 0 : index
    %1 = vector.load %arg5[%c0_1, %c0_2] : memref<1x32xf32, #tpu.memory_space<vmem>>, vector<1x32xf32>
    %c0_3 = arith.constant 0 : index
    %c0_4 = arith.constant 0 : index
    %2 = vector.load %arg0[%c0_3, %c0_4] : memref<16x16xf32, #tpu.memory_space<vmem>>, vector<16x16xf32>
    %c0_5 = arith.constant 0 : index
    %c0_6 = arith.constant 0 : index
    %3 = vector.load %arg2[%c0_5, %c0_6] : memref<16x128xf32, #tpu.memory_space<vmem>>, vector<16x128xf32>
    %cst = arith.constant dense<0.000000e+00> : vector<16x128xf32>
    %4 = tpu.matmul %2, %3, %cst {dimension_numbers = #tpu.dot_dimension_numbers<[1], [0], [0], [1], [0, 0, 1, 1], [], []>} : vector<16x16xf32>, vector<16x128xf32>, vector<16x128xf32> -> vector<16x128xf32>
    %c0_7 = arith.constant 0 : index
    %c0_8 = arith.constant 0 : index
    %5 = vector.load %arg4[%c0_7, %c0_8] : memref<1x128xf32, #tpu.memory_space<vmem>>, vector<1x128xf32>
    %6 = vector.broadcast %5 : vector<1x128xf32> to vector<16x128xf32>
    %7 = arith.addf %4, %6 : vector<16x128xf32>
    %8 = tpu.iota {dimensions = array<i32: 0>} : vector<2x1xi32>
    %c0_i32 = arith.constant 0 : i32
    %9 = vector.broadcast %c0_i32 : i32 to vector<2x1xi32>
    %c0_i32_9 = arith.constant 0 : i32
    %10 = vector.broadcast %c0_i32_9 : i32 to vector<2x1xi32>
    %11 = arith.cmpi eq, %8, %10 : vector<2x1xi32>
    %c0_10 = arith.constant 0 : index
    %12 = memref.load %arg1[%c0_10] : memref<2xi32, #tpu.memory_space<smem>>
    %13 = vector.broadcast %12 : i32 to vector<2x1xi32>
    %14 = arith.select %11, %13, %9 : vector<2x1xi1>, vector<2x1xi32>
    %c1_i32 = arith.constant 1 : i32
    %15 = vector.broadcast %c1_i32 : i32 to vector<2x1xi32>
    %16 = arith.cmpi eq, %8, %15 : vector<2x1xi32>
    %c1 = arith.constant 1 : index
    %17 = memref.load %arg1[%c1] : memref<2xi32, #tpu.memory_space<smem>>
    %18 = vector.broadcast %17 : i32 to vector<2x1xi32>
    %19 = arith.select %16, %18, %14 : vector<2x1xi1>, vector<2x1xi32>
    %cst_11 = arith.constant 0.000000e+00 : f32
    %20 = vector.broadcast %cst_11 : f32 to vector<2x32xf32>
    %cst_12 = arith.constant 0.000000e+00 : f32
    %21 = vector.broadcast %cst_12 : f32 to vector<2x32xf32>
    %cst_13 = arith.constant dense<0.000000e+00> : vector<2x128xf32>
    %22 = tpu.matmul %20, %0, %cst_13 {dimension_numbers = #tpu.dot_dimension_numbers<[1], [0], [0], [1], [0, 0, 1, 1], [], []>} : vector<2x32xf32>, vector<32x128xf32>, vector<2x128xf32> -> vector<2x128xf32>
    %23 = vector.extract_strided_slice %7 {offsets = [0, 0], sizes = [2, 128], strides = [1, 1]} : vector<16x128xf32> to vector<2x128xf32>
    %24 = arith.addf %22, %23 : vector<2x128xf32>
    %25 = vector.extract_strided_slice %24 {offsets = [0, 0], sizes = [2, 32], strides = [1, 1]} : vector<2x128xf32> to vector<2x32xf32>
    %cst_14 = arith.constant 5.000000e-01 : f32
    %26 = vector.broadcast %cst_14 : f32 to vector<2x32xf32>
    %27 = arith.mulf %26, %25 : vector<2x32xf32>
    %28 = math.tanh %27 : vector<2x32xf32>
    %cst_15 = arith.constant 5.000000e-01 : f32
    %29 = vector.broadcast %cst_15 : f32 to vector<2x32xf32>
    %30 = arith.mulf %29, %28 : vector<2x32xf32>
    %cst_16 = arith.constant 5.000000e-01 : f32
    %31 = vector.broadcast %cst_16 : f32 to vector<2x32xf32>
    %32 = arith.addf %30, %31 : vector<2x32xf32>
    %33 = vector.extract_strided_slice %24 {offsets = [0, 32], sizes = [2, 32], strides = [1, 1]} : vector<2x128xf32> to vector<2x32xf32>
    %cst_17 = arith.constant 5.000000e-01 : f32
    %34 = vector.broadcast %cst_17 : f32 to vector<2x32xf32>
    %35 = arith.mulf %34, %33 : vector<2x32xf32>
    %36 = math.tanh %35 : vector<2x32xf32>
    %cst_18 = arith.constant 5.000000e-01 : f32
    %37 = vector.broadcast %cst_18 : f32 to vector<2x32xf32>
    %38 = arith.mulf %37, %36 : vector<2x32xf32>
    %cst_19 = arith.constant 5.000000e-01 : f32
    %39 = vector.broadcast %cst_19 : f32 to vector<2x32xf32>
    %40 = arith.addf %38, %39 : vector<2x32xf32>
    %41 = vector.extract_strided_slice %24 {offsets = [0, 64], sizes = [2, 32], strides = [1, 1]} : vector<2x128xf32> to vector<2x32xf32>
    %42 = math.tanh %41 : vector<2x32xf32>
    %43 = vector.extract_strided_slice %24 {offsets = [0, 96], sizes = [2, 32], strides = [1, 1]} : vector<2x128xf32> to vector<2x32xf32>
    %cst_20 = arith.constant 5.000000e-01 : f32
    %44 = vector.broadcast %cst_20 : f32 to vector<2x32xf32>
    %45 = arith.mulf %44, %43 : vector<2x32xf32>
    %46 = math.tanh %45 : vector<2x32xf32>
    %cst_21 = arith.constant 5.000000e-01 : f32
    %47 = vector.broadcast %cst_21 : f32 to vector<2x32xf32>
    %48 = arith.mulf %47, %46 : vector<2x32xf32>
    %cst_22 = arith.constant 5.000000e-01 : f32
    %49 = vector.broadcast %cst_22 : f32 to vector<2x32xf32>
    %50 = arith.addf %48, %49 : vector<2x32xf32>
    %51 = arith.mulf %40, %21 : vector<2x32xf32>
    %52 = arith.mulf %32, %42 : vector<2x32xf32>
    %53 = arith.addf %51, %52 : vector<2x32xf32>
    %54 = math.tanh %53 : vector<2x32xf32>
    %55 = arith.mulf %50, %54 : vector<2x32xf32>
    %c0_i32_23 = arith.constant 0 : i32
    %56 = vector.broadcast %c0_i32_23 : i32 to vector<2x1xi32>
    %57 = arith.cmpi sgt, %19, %56 : vector<2x1xi32>
    %cst_24 = arith.constant 0.000000e+00 : f32
    %58 = vector.shape_cast %57 : vector<2x1xi1> to vector<2x1xi1>
    %59 = vector.broadcast %58 : vector<2x1xi1> to vector<2x32xi1>
    %60 = vector.broadcast %cst_24 : f32 to vector<2x32xf32>
    %61 = arith.select %59, %55, %60 : vector<2x32xi1>, vector<2x32xf32>
    %cst_25 = arith.constant dense<0.000000e+00> : vector<2x128xf32>
    %62 = tpu.matmul %55, %0, %cst_25 {dimension_numbers = #tpu.dot_dimension_numbers<[1], [0], [0], [1], [0, 0, 1, 1], [], []>} : vector<2x32xf32>, vector<32x128xf32>, vector<2x128xf32> -> vector<2x128xf32>
    %63 = vector.extract_strided_slice %7 {offsets = [2, 0], sizes = [2, 128], strides = [1, 1]} : vector<16x128xf32> to vector<2x128xf32>
    %64 = arith.addf %62, %63 : vector<2x128xf32>
    %65 = vector.extract_strided_slice %64 {offsets = [0, 0], sizes = [2, 32], strides = [1, 1]} : vector<2x128xf32> to vector<2x32xf32>
    %cst_26 = arith.constant 5.000000e-01 : f32
    %66 = vector.broadcast %cst_26 : f32 to vector<2x32xf32>
    %67 = arith.mulf %66, %65 : vector<2x32xf32>
    %68 = math.tanh %67 : vector<2x32xf32>
    %cst_27 = arith.constant 5.000000e-01 : f32
    %69 = vector.broadcast %cst_27 : f32 to vector<2x32xf32>
    %70 = arith.mulf %69, %68 : vector<2x32xf32>
    %cst_28 = arith.constant 5.000000e-01 : f32
    %71 = vector.broadcast %cst_28 : f32 to vector<2x32xf32>
    %72 = arith.addf %70, %71 : vector<2x32xf32>
    %73 = vector.extract_strided_slice %64 {offsets = [0, 32], sizes = [2, 32], strides = [1, 1]} : vector<2x128xf32> to vector<2x32xf32>
    %cst_29 = arith.constant 5.000000e-01 : f32
    %74 = vector.broadcast %cst_29 : f32 to vector<2x32xf32>
    %75 = arith.mulf %74, %73 : vector<2x32xf32>
    %76 = math.tanh %75 : vector<2x32xf32>
    %cst_30 = arith.constant 5.000000e-01 : f32
    %77 = vector.broadcast %cst_30 : f32 to vector<2x32xf32>
    %78 = arith.mulf %77, %76 : vector<2x32xf32>
    %cst_31 = arith.constant 5.000000e-01 : f32
    %79 = vector.broadcast %cst_31 : f32 to vector<2x32xf32>
    %80 = arith.addf %78, %79 : vector<2x32xf32>
    %81 = vector.extract_strided_slice %64 {offsets = [0, 64], sizes = [2, 32], strides = [1, 1]} : vector<2x128xf32> to vector<2x32xf32>
    %82 = math.tanh %81 : vector<2x32xf32>
    %83 = vector.extract_strided_slice %64 {offsets = [0, 96], sizes = [2, 32], strides = [1, 1]} : vector<2x128xf32> to vector<2x32xf32>
    %cst_32 = arith.constant 5.000000e-01 : f32
    %84 = vector.broadcast %cst_32 : f32 to vector<2x32xf32>
    %85 = arith.mulf %84, %83 : vector<2x32xf32>
    %86 = math.tanh %85 : vector<2x32xf32>
    %cst_33 = arith.constant 5.000000e-01 : f32
    %87 = vector.broadcast %cst_33 : f32 to vector<2x32xf32>
    %88 = arith.mulf %87, %86 : vector<2x32xf32>
    %cst_34 = arith.constant 5.000000e-01 : f32
    %89 = vector.broadcast %cst_34 : f32 to vector<2x32xf32>
    %90 = arith.addf %88, %89 : vector<2x32xf32>
    %91 = arith.mulf %80, %53 : vector<2x32xf32>
    %92 = arith.mulf %72, %82 : vector<2x32xf32>
    %93 = arith.addf %91, %92 : vector<2x32xf32>
    %94 = math.tanh %93 : vector<2x32xf32>
    %95 = arith.mulf %90, %94 : vector<2x32xf32>
    %c1_i32_35 = arith.constant 1 : i32
    %96 = vector.broadcast %c1_i32_35 : i32 to vector<2x1xi32>
    %97 = arith.cmpi sgt, %19, %96 : vector<2x1xi32>
    %cst_36 = arith.constant 0.000000e+00 : f32
    %98 = vector.shape_cast %97 : vector<2x1xi1> to vector<2x1xi1>
    %99 = vector.broadcast %98 : vector<2x1xi1> to vector<2x32xi1>
    %100 = vector.broadcast %cst_36 : f32 to vector<2x32xf32>
    %101 = arith.select %99, %95, %100 : vector<2x32xi1>, vector<2x32xf32>
    %cst_37 = arith.constant dense<0.000000e+00> : vector<2x128xf32>
    %102 = tpu.matmul %95, %0, %cst_37 {dimension_numbers = #tpu.dot_dimension_numbers<[1], [0], [0], [1], [0, 0, 1, 1], [], []>} : vector<2x32xf32>, vector<32x128xf32>, vector<2x128xf32> -> vector<2x128xf32>
    %103 = vector.extract_strided_slice %7 {offsets = [4, 0], sizes = [2, 128], strides = [1, 1]} : vector<16x128xf32> to vector<2x128xf32>
    %104 = arith.addf %102, %103 : vector<2x128xf32>
    %105 = vector.extract_strided_slice %104 {offsets = [0, 0], sizes = [2, 32], strides = [1, 1]} : vector<2x128xf32> to vector<2x32xf32>
    %cst_38 = arith.constant 5.000000e-01 : f32
    %106 = vector.broadcast %cst_38 : f32 to vector<2x32xf32>
    %107 = arith.mulf %106, %105 : vector<2x32xf32>
    %108 = math.tanh %107 : vector<2x32xf32>
    %cst_39 = arith.constant 5.000000e-01 : f32
    %109 = vector.broadcast %cst_39 : f32 to vector<2x32xf32>
    %110 = arith.mulf %109, %108 : vector<2x32xf32>
    %cst_40 = arith.constant 5.000000e-01 : f32
    %111 = vector.broadcast %cst_40 : f32 to vector<2x32xf32>
    %112 = arith.addf %110, %111 : vector<2x32xf32>
    %113 = vector.extract_strided_slice %104 {offsets = [0, 32], sizes = [2, 32], strides = [1, 1]} : vector<2x128xf32> to vector<2x32xf32>
    %cst_41 = arith.constant 5.000000e-01 : f32
    %114 = vector.broadcast %cst_41 : f32 to vector<2x32xf32>
    %115 = arith.mulf %114, %113 : vector<2x32xf32>
    %116 = math.tanh %115 : vector<2x32xf32>
    %cst_42 = arith.constant 5.000000e-01 : f32
    %117 = vector.broadcast %cst_42 : f32 to vector<2x32xf32>
    %118 = arith.mulf %117, %116 : vector<2x32xf32>
    %cst_43 = arith.constant 5.000000e-01 : f32
    %119 = vector.broadcast %cst_43 : f32 to vector<2x32xf32>
    %120 = arith.addf %118, %119 : vector<2x32xf32>
    %121 = vector.extract_strided_slice %104 {offsets = [0, 64], sizes = [2, 32], strides = [1, 1]} : vector<2x128xf32> to vector<2x32xf32>
    %122 = math.tanh %121 : vector<2x32xf32>
    %123 = vector.extract_strided_slice %104 {offsets = [0, 96], sizes = [2, 32], strides = [1, 1]} : vector<2x128xf32> to vector<2x32xf32>
    %cst_44 = arith.constant 5.000000e-01 : f32
    %124 = vector.broadcast %cst_44 : f32 to vector<2x32xf32>
    %125 = arith.mulf %124, %123 : vector<2x32xf32>
    %126 = math.tanh %125 : vector<2x32xf32>
    %cst_45 = arith.constant 5.000000e-01 : f32
    %127 = vector.broadcast %cst_45 : f32 to vector<2x32xf32>
    %128 = arith.mulf %127, %126 : vector<2x32xf32>
    %cst_46 = arith.constant 5.000000e-01 : f32
    %129 = vector.broadcast %cst_46 : f32 to vector<2x32xf32>
    %130 = arith.addf %128, %129 : vector<2x32xf32>
    %131 = arith.mulf %120, %93 : vector<2x32xf32>
    %132 = arith.mulf %112, %122 : vector<2x32xf32>
    %133 = arith.addf %131, %132 : vector<2x32xf32>
    %134 = math.tanh %133 : vector<2x32xf32>
    %135 = arith.mulf %130, %134 : vector<2x32xf32>
    %c2_i32 = arith.constant 2 : i32
    %136 = vector.broadcast %c2_i32 : i32 to vector<2x1xi32>
    %137 = arith.cmpi sgt, %19, %136 : vector<2x1xi32>
    %cst_47 = arith.constant 0.000000e+00 : f32
    %138 = vector.shape_cast %137 : vector<2x1xi1> to vector<2x1xi1>
    %139 = vector.broadcast %138 : vector<2x1xi1> to vector<2x32xi1>
    %140 = vector.broadcast %cst_47 : f32 to vector<2x32xf32>
    %141 = arith.select %139, %135, %140 : vector<2x32xi1>, vector<2x32xf32>
    %cst_48 = arith.constant dense<0.000000e+00> : vector<2x128xf32>
    %142 = tpu.matmul %135, %0, %cst_48 {dimension_numbers = #tpu.dot_dimension_numbers<[1], [0], [0], [1], [0, 0, 1, 1], [], []>} : vector<2x32xf32>, vector<32x128xf32>, vector<2x128xf32> -> vector<2x128xf32>
    %143 = vector.extract_strided_slice %7 {offsets = [6, 0], sizes = [2, 128], strides = [1, 1]} : vector<16x128xf32> to vector<2x128xf32>
    %144 = arith.addf %142, %143 : vector<2x128xf32>
    %145 = vector.extract_strided_slice %144 {offsets = [0, 0], sizes = [2, 32], strides = [1, 1]} : vector<2x128xf32> to vector<2x32xf32>
    %cst_49 = arith.constant 5.000000e-01 : f32
    %146 = vector.broadcast %cst_49 : f32 to vector<2x32xf32>
    %147 = arith.mulf %146, %145 : vector<2x32xf32>
    %148 = math.tanh %147 : vector<2x32xf32>
    %cst_50 = arith.constant 5.000000e-01 : f32
    %149 = vector.broadcast %cst_50 : f32 to vector<2x32xf32>
    %150 = arith.mulf %149, %148 : vector<2x32xf32>
    %cst_51 = arith.constant 5.000000e-01 : f32
    %151 = vector.broadcast %cst_51 : f32 to vector<2x32xf32>
    %152 = arith.addf %150, %151 : vector<2x32xf32>
    %153 = vector.extract_strided_slice %144 {offsets = [0, 32], sizes = [2, 32], strides = [1, 1]} : vector<2x128xf32> to vector<2x32xf32>
    %cst_52 = arith.constant 5.000000e-01 : f32
    %154 = vector.broadcast %cst_52 : f32 to vector<2x32xf32>
    %155 = arith.mulf %154, %153 : vector<2x32xf32>
    %156 = math.tanh %155 : vector<2x32xf32>
    %cst_53 = arith.constant 5.000000e-01 : f32
    %157 = vector.broadcast %cst_53 : f32 to vector<2x32xf32>
    %158 = arith.mulf %157, %156 : vector<2x32xf32>
    %cst_54 = arith.constant 5.000000e-01 : f32
    %159 = vector.broadcast %cst_54 : f32 to vector<2x32xf32>
    %160 = arith.addf %158, %159 : vector<2x32xf32>
    %161 = vector.extract_strided_slice %144 {offsets = [0, 64], sizes = [2, 32], strides = [1, 1]} : vector<2x128xf32> to vector<2x32xf32>
    %162 = math.tanh %161 : vector<2x32xf32>
    %163 = vector.extract_strided_slice %144 {offsets = [0, 96], sizes = [2, 32], strides = [1, 1]} : vector<2x128xf32> to vector<2x32xf32>
    %cst_55 = arith.constant 5.000000e-01 : f32
    %164 = vector.broadcast %cst_55 : f32 to vector<2x32xf32>
    %165 = arith.mulf %164, %163 : vector<2x32xf32>
    %166 = math.tanh %165 : vector<2x32xf32>
    %cst_56 = arith.constant 5.000000e-01 : f32
    %167 = vector.broadcast %cst_56 : f32 to vector<2x32xf32>
    %168 = arith.mulf %167, %166 : vector<2x32xf32>
    %cst_57 = arith.constant 5.000000e-01 : f32
    %169 = vector.broadcast %cst_57 : f32 to vector<2x32xf32>
    %170 = arith.addf %168, %169 : vector<2x32xf32>
    %171 = arith.mulf %160, %133 : vector<2x32xf32>
    %172 = arith.mulf %152, %162 : vector<2x32xf32>
    %173 = arith.addf %171, %172 : vector<2x32xf32>
    %174 = math.tanh %173 : vector<2x32xf32>
    %175 = arith.mulf %170, %174 : vector<2x32xf32>
    %c3_i32 = arith.constant 3 : i32
    %176 = vector.broadcast %c3_i32 : i32 to vector<2x1xi32>
    %177 = arith.cmpi sgt, %19, %176 : vector<2x1xi32>
    %cst_58 = arith.constant 0.000000e+00 : f32
    %178 = vector.shape_cast %177 : vector<2x1xi1> to vector<2x1xi1>
    %179 = vector.broadcast %178 : vector<2x1xi1> to vector<2x32xi1>
    %180 = vector.broadcast %cst_58 : f32 to vector<2x32xf32>
    %181 = arith.select %179, %175, %180 : vector<2x32xi1>, vector<2x32xf32>
    %cst_59 = arith.constant dense<0.000000e+00> : vector<2x128xf32>
    %182 = tpu.matmul %175, %0, %cst_59 {dimension_numbers = #tpu.dot_dimension_numbers<[1], [0], [0], [1], [0, 0, 1, 1], [], []>} : vector<2x32xf32>, vector<32x128xf32>, vector<2x128xf32> -> vector<2x128xf32>
    %183 = vector.extract_strided_slice %7 {offsets = [8, 0], sizes = [2, 128], strides = [1, 1]} : vector<16x128xf32> to vector<2x128xf32>
    %184 = arith.addf %182, %183 : vector<2x128xf32>
    %185 = vector.extract_strided_slice %184 {offsets = [0, 0], sizes = [2, 32], strides = [1, 1]} : vector<2x128xf32> to vector<2x32xf32>
    %cst_60 = arith.constant 5.000000e-01 : f32
    %186 = vector.broadcast %cst_60 : f32 to vector<2x32xf32>
    %187 = arith.mulf %186, %185 : vector<2x32xf32>
    %188 = math.tanh %187 : vector<2x32xf32>
    %cst_61 = arith.constant 5.000000e-01 : f32
    %189 = vector.broadcast %cst_61 : f32 to vector<2x32xf32>
    %190 = arith.mulf %189, %188 : vector<2x32xf32>
    %cst_62 = arith.constant 5.000000e-01 : f32
    %191 = vector.broadcast %cst_62 : f32 to vector<2x32xf32>
    %192 = arith.addf %190, %191 : vector<2x32xf32>
    %193 = vector.extract_strided_slice %184 {offsets = [0, 32], sizes = [2, 32], strides = [1, 1]} : vector<2x128xf32> to vector<2x32xf32>
    %cst_63 = arith.constant 5.000000e-01 : f32
    %194 = vector.broadcast %cst_63 : f32 to vector<2x32xf32>
    %195 = arith.mulf %194, %193 : vector<2x32xf32>
    %196 = math.tanh %195 : vector<2x32xf32>
    %cst_64 = arith.constant 5.000000e-01 : f32
    %197 = vector.broadcast %cst_64 : f32 to vector<2x32xf32>
    %198 = arith.mulf %197, %196 : vector<2x32xf32>
    %cst_65 = arith.constant 5.000000e-01 : f32
    %199 = vector.broadcast %cst_65 : f32 to vector<2x32xf32>
    %200 = arith.addf %198, %199 : vector<2x32xf32>
    %201 = vector.extract_strided_slice %184 {offsets = [0, 64], sizes = [2, 32], strides = [1, 1]} : vector<2x128xf32> to vector<2x32xf32>
    %202 = math.tanh %201 : vector<2x32xf32>
    %203 = vector.extract_strided_slice %184 {offsets = [0, 96], sizes = [2, 32], strides = [1, 1]} : vector<2x128xf32> to vector<2x32xf32>
    %cst_66 = arith.constant 5.000000e-01 : f32
    %204 = vector.broadcast %cst_66 : f32 to vector<2x32xf32>
    %205 = arith.mulf %204, %203 : vector<2x32xf32>
    %206 = math.tanh %205 : vector<2x32xf32>
    %cst_67 = arith.constant 5.000000e-01 : f32
    %207 = vector.broadcast %cst_67 : f32 to vector<2x32xf32>
    %208 = arith.mulf %207, %206 : vector<2x32xf32>
    %cst_68 = arith.constant 5.000000e-01 : f32
    %209 = vector.broadcast %cst_68 : f32 to vector<2x32xf32>
    %210 = arith.addf %208, %209 : vector<2x32xf32>
    %211 = arith.mulf %200, %173 : vector<2x32xf32>
    %212 = arith.mulf %192, %202 : vector<2x32xf32>
    %213 = arith.addf %211, %212 : vector<2x32xf32>
    %214 = math.tanh %213 : vector<2x32xf32>
    %215 = arith.mulf %210, %214 : vector<2x32xf32>
    %c4_i32 = arith.constant 4 : i32
    %216 = vector.broadcast %c4_i32 : i32 to vector<2x1xi32>
    %217 = arith.cmpi sgt, %19, %216 : vector<2x1xi32>
    %cst_69 = arith.constant 0.000000e+00 : f32
    %218 = vector.shape_cast %217 : vector<2x1xi1> to vector<2x1xi1>
    %219 = vector.broadcast %218 : vector<2x1xi1> to vector<2x32xi1>
    %220 = vector.broadcast %cst_69 : f32 to vector<2x32xf32>
    %221 = arith.select %219, %215, %220 : vector<2x32xi1>, vector<2x32xf32>
    %cst_70 = arith.constant dense<0.000000e+00> : vector<2x128xf32>
    %222 = tpu.matmul %215, %0, %cst_70 {dimension_numbers = #tpu.dot_dimension_numbers<[1], [0], [0], [1], [0, 0, 1, 1], [], []>} : vector<2x32xf32>, vector<32x128xf32>, vector<2x128xf32> -> vector<2x128xf32>
    %223 = vector.extract_strided_slice %7 {offsets = [10, 0], sizes = [2, 128], strides = [1, 1]} : vector<16x128xf32> to vector<2x128xf32>
    %224 = arith.addf %222, %223 : vector<2x128xf32>
    %225 = vector.extract_strided_slice %224 {offsets = [0, 0], sizes = [2, 32], strides = [1, 1]} : vector<2x128xf32> to vector<2x32xf32>
    %cst_71 = arith.constant 5.000000e-01 : f32
    %226 = vector.broadcast %cst_71 : f32 to vector<2x32xf32>
    %227 = arith.mulf %226, %225 : vector<2x32xf32>
    %228 = math.tanh %227 : vector<2x32xf32>
    %cst_72 = arith.constant 5.000000e-01 : f32
    %229 = vector.broadcast %cst_72 : f32 to vector<2x32xf32>
    %230 = arith.mulf %229, %228 : vector<2x32xf32>
    %cst_73 = arith.constant 5.000000e-01 : f32
    %231 = vector.broadcast %cst_73 : f32 to vector<2x32xf32>
    %232 = arith.addf %230, %231 : vector<2x32xf32>
    %233 = vector.extract_strided_slice %224 {offsets = [0, 32], sizes = [2, 32], strides = [1, 1]} : vector<2x128xf32> to vector<2x32xf32>
    %cst_74 = arith.constant 5.000000e-01 : f32
    %234 = vector.broadcast %cst_74 : f32 to vector<2x32xf32>
    %235 = arith.mulf %234, %233 : vector<2x32xf32>
    %236 = math.tanh %235 : vector<2x32xf32>
    %cst_75 = arith.constant 5.000000e-01 : f32
    %237 = vector.broadcast %cst_75 : f32 to vector<2x32xf32>
    %238 = arith.mulf %237, %236 : vector<2x32xf32>
    %cst_76 = arith.constant 5.000000e-01 : f32
    %239 = vector.broadcast %cst_76 : f32 to vector<2x32xf32>
    %240 = arith.addf %238, %239 : vector<2x32xf32>
    %241 = vector.extract_strided_slice %224 {offsets = [0, 64], sizes = [2, 32], strides = [1, 1]} : vector<2x128xf32> to vector<2x32xf32>
    %242 = math.tanh %241 : vector<2x32xf32>
    %243 = vector.extract_strided_slice %224 {offsets = [0, 96], sizes = [2, 32], strides = [1, 1]} : vector<2x128xf32> to vector<2x32xf32>
    %cst_77 = arith.constant 5.000000e-01 : f32
    %244 = vector.broadcast %cst_77 : f32 to vector<2x32xf32>
    %245 = arith.mulf %244, %243 : vector<2x32xf32>
    %246 = math.tanh %245 : vector<2x32xf32>
    %cst_78 = arith.constant 5.000000e-01 : f32
    %247 = vector.broadcast %cst_78 : f32 to vector<2x32xf32>
    %248 = arith.mulf %247, %246 : vector<2x32xf32>
    %cst_79 = arith.constant 5.000000e-01 : f32
    %249 = vector.broadcast %cst_79 : f32 to vector<2x32xf32>
    %250 = arith.addf %248, %249 : vector<2x32xf32>
    %251 = arith.mulf %240, %213 : vector<2x32xf32>
    %252 = arith.mulf %232, %242 : vector<2x32xf32>
    %253 = arith.addf %251, %252 : vector<2x32xf32>
    %254 = math.tanh %253 : vector<2x32xf32>
    %255 = arith.mulf %250, %254 : vector<2x32xf32>
    %c5_i32 = arith.constant 5 : i32
    %256 = vector.broadcast %c5_i32 : i32 to vector<2x1xi32>
    %257 = arith.cmpi sgt, %19, %256 : vector<2x1xi32>
    %cst_80 = arith.constant 0.000000e+00 : f32
    %258 = vector.shape_cast %257 : vector<2x1xi1> to vector<2x1xi1>
    %259 = vector.broadcast %258 : vector<2x1xi1> to vector<2x32xi1>
    %260 = vector.broadcast %cst_80 : f32 to vector<2x32xf32>
    %261 = arith.select %259, %255, %260 : vector<2x32xi1>, vector<2x32xf32>
    %cst_81 = arith.constant dense<0.000000e+00> : vector<2x128xf32>
    %262 = tpu.matmul %255, %0, %cst_81 {dimension_numbers = #tpu.dot_dimension_numbers<[1], [0], [0], [1], [0, 0, 1, 1], [], []>} : vector<2x32xf32>, vector<32x128xf32>, vector<2x128xf32> -> vector<2x128xf32>
    %263 = vector.extract_strided_slice %7 {offsets = [12, 0], sizes = [2, 128], strides = [1, 1]} : vector<16x128xf32> to vector<2x128xf32>
    %264 = arith.addf %262, %263 : vector<2x128xf32>
    %265 = vector.extract_strided_slice %264 {offsets = [0, 0], sizes = [2, 32], strides = [1, 1]} : vector<2x128xf32> to vector<2x32xf32>
    %cst_82 = arith.constant 5.000000e-01 : f32
    %266 = vector.broadcast %cst_82 : f32 to vector<2x32xf32>
    %267 = arith.mulf %266, %265 : vector<2x32xf32>
    %268 = math.tanh %267 : vector<2x32xf32>
    %cst_83 = arith.constant 5.000000e-01 : f32
    %269 = vector.broadcast %cst_83 : f32 to vector<2x32xf32>
    %270 = arith.mulf %269, %268 : vector<2x32xf32>
    %cst_84 = arith.constant 5.000000e-01 : f32
    %271 = vector.broadcast %cst_84 : f32 to vector<2x32xf32>
    %272 = arith.addf %270, %271 : vector<2x32xf32>
    %273 = vector.extract_strided_slice %264 {offsets = [0, 32], sizes = [2, 32], strides = [1, 1]} : vector<2x128xf32> to vector<2x32xf32>
    %cst_85 = arith.constant 5.000000e-01 : f32
    %274 = vector.broadcast %cst_85 : f32 to vector<2x32xf32>
    %275 = arith.mulf %274, %273 : vector<2x32xf32>
    %276 = math.tanh %275 : vector<2x32xf32>
    %cst_86 = arith.constant 5.000000e-01 : f32
    %277 = vector.broadcast %cst_86 : f32 to vector<2x32xf32>
    %278 = arith.mulf %277, %276 : vector<2x32xf32>
    %cst_87 = arith.constant 5.000000e-01 : f32
    %279 = vector.broadcast %cst_87 : f32 to vector<2x32xf32>
    %280 = arith.addf %278, %279 : vector<2x32xf32>
    %281 = vector.extract_strided_slice %264 {offsets = [0, 64], sizes = [2, 32], strides = [1, 1]} : vector<2x128xf32> to vector<2x32xf32>
    %282 = math.tanh %281 : vector<2x32xf32>
    %283 = vector.extract_strided_slice %264 {offsets = [0, 96], sizes = [2, 32], strides = [1, 1]} : vector<2x128xf32> to vector<2x32xf32>
    %cst_88 = arith.constant 5.000000e-01 : f32
    %284 = vector.broadcast %cst_88 : f32 to vector<2x32xf32>
    %285 = arith.mulf %284, %283 : vector<2x32xf32>
    %286 = math.tanh %285 : vector<2x32xf32>
    %cst_89 = arith.constant 5.000000e-01 : f32
    %287 = vector.broadcast %cst_89 : f32 to vector<2x32xf32>
    %288 = arith.mulf %287, %286 : vector<2x32xf32>
    %cst_90 = arith.constant 5.000000e-01 : f32
    %289 = vector.broadcast %cst_90 : f32 to vector<2x32xf32>
    %290 = arith.addf %288, %289 : vector<2x32xf32>
    %291 = arith.mulf %280, %253 : vector<2x32xf32>
    %292 = arith.mulf %272, %282 : vector<2x32xf32>
    %293 = arith.addf %291, %292 : vector<2x32xf32>
    %294 = math.tanh %293 : vector<2x32xf32>
    %295 = arith.mulf %290, %294 : vector<2x32xf32>
    %c6_i32 = arith.constant 6 : i32
    %296 = vector.broadcast %c6_i32 : i32 to vector<2x1xi32>
    %297 = arith.cmpi sgt, %19, %296 : vector<2x1xi32>
    %cst_91 = arith.constant 0.000000e+00 : f32
    %298 = vector.shape_cast %297 : vector<2x1xi1> to vector<2x1xi1>
    %299 = vector.broadcast %298 : vector<2x1xi1> to vector<2x32xi1>
    %300 = vector.broadcast %cst_91 : f32 to vector<2x32xf32>
    %301 = arith.select %299, %295, %300 : vector<2x32xi1>, vector<2x32xf32>
    %cst_92 = arith.constant dense<0.000000e+00> : vector<2x128xf32>
    %302 = tpu.matmul %295, %0, %cst_92 {dimension_numbers = #tpu.dot_dimension_numbers<[1], [0], [0], [1], [0, 0, 1, 1], [], []>} : vector<2x32xf32>, vector<32x128xf32>, vector<2x128xf32> -> vector<2x128xf32>
    %303 = vector.extract_strided_slice %7 {offsets = [14, 0], sizes = [2, 128], strides = [1, 1]} : vector<16x128xf32> to vector<2x128xf32>
    %304 = arith.addf %302, %303 : vector<2x128xf32>
    %305 = vector.extract_strided_slice %304 {offsets = [0, 0], sizes = [2, 32], strides = [1, 1]} : vector<2x128xf32> to vector<2x32xf32>
    %cst_93 = arith.constant 5.000000e-01 : f32
    %306 = vector.broadcast %cst_93 : f32 to vector<2x32xf32>
    %307 = arith.mulf %306, %305 : vector<2x32xf32>
    %308 = math.tanh %307 : vector<2x32xf32>
    %cst_94 = arith.constant 5.000000e-01 : f32
    %309 = vector.broadcast %cst_94 : f32 to vector<2x32xf32>
    %310 = arith.mulf %309, %308 : vector<2x32xf32>
    %cst_95 = arith.constant 5.000000e-01 : f32
    %311 = vector.broadcast %cst_95 : f32 to vector<2x32xf32>
    %312 = arith.addf %310, %311 : vector<2x32xf32>
    %313 = vector.extract_strided_slice %304 {offsets = [0, 32], sizes = [2, 32], strides = [1, 1]} : vector<2x128xf32> to vector<2x32xf32>
    %cst_96 = arith.constant 5.000000e-01 : f32
    %314 = vector.broadcast %cst_96 : f32 to vector<2x32xf32>
    %315 = arith.mulf %314, %313 : vector<2x32xf32>
    %316 = math.tanh %315 : vector<2x32xf32>
    %cst_97 = arith.constant 5.000000e-01 : f32
    %317 = vector.broadcast %cst_97 : f32 to vector<2x32xf32>
    %318 = arith.mulf %317, %316 : vector<2x32xf32>
    %cst_98 = arith.constant 5.000000e-01 : f32
    %319 = vector.broadcast %cst_98 : f32 to vector<2x32xf32>
    %320 = arith.addf %318, %319 : vector<2x32xf32>
    %321 = vector.extract_strided_slice %304 {offsets = [0, 64], sizes = [2, 32], strides = [1, 1]} : vector<2x128xf32> to vector<2x32xf32>
    %322 = math.tanh %321 : vector<2x32xf32>
    %323 = vector.extract_strided_slice %304 {offsets = [0, 96], sizes = [2, 32], strides = [1, 1]} : vector<2x128xf32> to vector<2x32xf32>
    %cst_99 = arith.constant 5.000000e-01 : f32
    %324 = vector.broadcast %cst_99 : f32 to vector<2x32xf32>
    %325 = arith.mulf %324, %323 : vector<2x32xf32>
    %326 = math.tanh %325 : vector<2x32xf32>
    %cst_100 = arith.constant 5.000000e-01 : f32
    %327 = vector.broadcast %cst_100 : f32 to vector<2x32xf32>
    %328 = arith.mulf %327, %326 : vector<2x32xf32>
    %cst_101 = arith.constant 5.000000e-01 : f32
    %329 = vector.broadcast %cst_101 : f32 to vector<2x32xf32>
    %330 = arith.addf %328, %329 : vector<2x32xf32>
    %331 = arith.mulf %320, %293 : vector<2x32xf32>
    %332 = arith.mulf %312, %322 : vector<2x32xf32>
    %333 = arith.addf %331, %332 : vector<2x32xf32>
    %334 = math.tanh %333 : vector<2x32xf32>
    %335 = arith.mulf %330, %334 : vector<2x32xf32>
    %c7_i32 = arith.constant 7 : i32
    %336 = vector.broadcast %c7_i32 : i32 to vector<2x1xi32>
    %337 = arith.cmpi sgt, %19, %336 : vector<2x1xi32>
    %cst_102 = arith.constant 0.000000e+00 : f32
    %338 = vector.shape_cast %337 : vector<2x1xi1> to vector<2x1xi1>
    %339 = vector.broadcast %338 : vector<2x1xi1> to vector<2x32xi1>
    %340 = vector.broadcast %cst_102 : f32 to vector<2x32xf32>
    %341 = arith.select %339, %335, %340 : vector<2x32xi1>, vector<2x32xf32>
    %342 = vector.broadcast %1 : vector<1x32xf32> to vector<2x32xf32>
    %343 = arith.mulf %61, %342 : vector<2x32xf32>
    %cst_103 = arith.constant dense<0.000000e+00> : vector<2xf32>
    %344 = vector.multi_reduction <add>, %343, %cst_103 [1] : vector<2x32xf32> to vector<2xf32>
    %345 = vector.shape_cast %344 : vector<2xf32> to vector<2x1xf32>
    %346 = vector.broadcast %1 : vector<1x32xf32> to vector<2x32xf32>
    %347 = arith.mulf %101, %346 : vector<2x32xf32>
    %cst_104 = arith.constant dense<0.000000e+00> : vector<2xf32>
    %348 = vector.multi_reduction <add>, %347, %cst_104 [1] : vector<2x32xf32> to vector<2xf32>
    %349 = vector.shape_cast %348 : vector<2xf32> to vector<2x1xf32>
    %350 = vector.broadcast %1 : vector<1x32xf32> to vector<2x32xf32>
    %351 = arith.mulf %141, %350 : vector<2x32xf32>
    %cst_105 = arith.constant dense<0.000000e+00> : vector<2xf32>
    %352 = vector.multi_reduction <add>, %351, %cst_105 [1] : vector<2x32xf32> to vector<2xf32>
    %353 = vector.shape_cast %352 : vector<2xf32> to vector<2x1xf32>
    %354 = vector.broadcast %1 : vector<1x32xf32> to vector<2x32xf32>
    %355 = arith.mulf %181, %354 : vector<2x32xf32>
    %cst_106 = arith.constant dense<0.000000e+00> : vector<2xf32>
    %356 = vector.multi_reduction <add>, %355, %cst_106 [1] : vector<2x32xf32> to vector<2xf32>
    %357 = vector.shape_cast %356 : vector<2xf32> to vector<2x1xf32>
    %358 = vector.broadcast %1 : vector<1x32xf32> to vector<2x32xf32>
    %359 = arith.mulf %221, %358 : vector<2x32xf32>
    %cst_107 = arith.constant dense<0.000000e+00> : vector<2xf32>
    %360 = vector.multi_reduction <add>, %359, %cst_107 [1] : vector<2x32xf32> to vector<2xf32>
    %361 = vector.shape_cast %360 : vector<2xf32> to vector<2x1xf32>
    %362 = vector.broadcast %1 : vector<1x32xf32> to vector<2x32xf32>
    %363 = arith.mulf %261, %362 : vector<2x32xf32>
    %cst_108 = arith.constant dense<0.000000e+00> : vector<2xf32>
    %364 = vector.multi_reduction <add>, %363, %cst_108 [1] : vector<2x32xf32> to vector<2xf32>
    %365 = vector.shape_cast %364 : vector<2xf32> to vector<2x1xf32>
    %366 = vector.broadcast %1 : vector<1x32xf32> to vector<2x32xf32>
    %367 = arith.mulf %301, %366 : vector<2x32xf32>
    %cst_109 = arith.constant dense<0.000000e+00> : vector<2xf32>
    %368 = vector.multi_reduction <add>, %367, %cst_109 [1] : vector<2x32xf32> to vector<2xf32>
    %369 = vector.shape_cast %368 : vector<2xf32> to vector<2x1xf32>
    %370 = vector.broadcast %1 : vector<1x32xf32> to vector<2x32xf32>
    %371 = arith.mulf %341, %370 : vector<2x32xf32>
    %cst_110 = arith.constant dense<0.000000e+00> : vector<2xf32>
    %372 = vector.multi_reduction <add>, %371, %cst_110 [1] : vector<2x32xf32> to vector<2xf32>
    %373 = vector.shape_cast %372 : vector<2xf32> to vector<2x1xf32>
    %374 = tpu.concatenate %345, %349, %353, %357, %361, %365, %369, %373 in 0 : vector<2x1xf32>, vector<2x1xf32>, vector<2x1xf32>, vector<2x1xf32>, vector<2x1xf32>, vector<2x1xf32>, vector<2x1xf32>, vector<2x1xf32> -> vector<16x1xf32>
    %375 = vector.extract_strided_slice %374 {offsets = [0, 0], sizes = [8, 1], strides = [1, 1]} : vector<16x1xf32> to vector<8x1xf32>
    %376 = vector.shape_cast %375 : vector<8x1xf32> to vector<1x8x1xf32>
    %cst_111 = arith.constant dense<0xFF800000> : vector<1xf32>
    %377 = vector.multi_reduction <maximumf>, %376, %cst_111 [1, 2] : vector<1x8x1xf32> to vector<1xf32>
    %378 = vector.shape_cast %377 : vector<1xf32> to vector<1x1x1xf32>
    %379 = vector.extract %378[0, 0, 0] : f32 from vector<1x1x1xf32>
    %380 = vector.broadcast %379 : f32 to vector<1x1xf32>
    %381 = vector.broadcast %380 : vector<1x1xf32> to vector<8x1xf32>
    %382 = arith.subf %375, %381 : vector<8x1xf32>
    %383 = math.exp %382 : vector<8x1xf32>
    %384 = vector.shape_cast %383 : vector<8x1xf32> to vector<1x8x1xf32>
    %cst_112 = arith.constant dense<0.000000e+00> : vector<1xf32>
    %385 = vector.multi_reduction <add>, %384, %cst_112 [1, 2] : vector<1x8x1xf32> to vector<1xf32>
    %386 = vector.shape_cast %385 : vector<1xf32> to vector<1x1x1xf32>
    %387 = vector.extract %386[0, 0, 0] : f32 from vector<1x1x1xf32>
    %388 = vector.broadcast %387 : f32 to vector<1x1xf32>
    %389 = vector.broadcast %388 : vector<1x1xf32> to vector<8x1xf32>
    %390 = arith.divf %383, %389 : vector<8x1xf32>
    %391 = vector.extract_strided_slice %374 {offsets = [8, 0], sizes = [8, 1], strides = [1, 1]} : vector<16x1xf32> to vector<8x1xf32>
    %392 = vector.shape_cast %391 : vector<8x1xf32> to vector<1x8x1xf32>
    %cst_113 = arith.constant dense<0xFF800000> : vector<1xf32>
    %393 = vector.multi_reduction <maximumf>, %392, %cst_113 [1, 2] : vector<1x8x1xf32> to vector<1xf32>
    %394 = vector.shape_cast %393 : vector<1xf32> to vector<1x1x1xf32>
    %395 = vector.extract %394[0, 0, 0] : f32 from vector<1x1x1xf32>
    %396 = vector.broadcast %395 : f32 to vector<1x1xf32>
    %397 = vector.broadcast %396 : vector<1x1xf32> to vector<8x1xf32>
    %398 = arith.subf %391, %397 : vector<8x1xf32>
    %399 = math.exp %398 : vector<8x1xf32>
    %400 = vector.shape_cast %399 : vector<8x1xf32> to vector<1x8x1xf32>
    %cst_114 = arith.constant dense<0.000000e+00> : vector<1xf32>
    %401 = vector.multi_reduction <add>, %400, %cst_114 [1, 2] : vector<1x8x1xf32> to vector<1xf32>
    %402 = vector.shape_cast %401 : vector<1xf32> to vector<1x1x1xf32>
    %403 = vector.extract %402[0, 0, 0] : f32 from vector<1x1x1xf32>
    %404 = vector.broadcast %403 : f32 to vector<1x1xf32>
    %405 = vector.broadcast %404 : vector<1x1xf32> to vector<8x1xf32>
    %406 = arith.divf %399, %405 : vector<8x1xf32>
    %cst_115 = arith.constant 0.000000e+00 : f32
    %407 = vector.broadcast %cst_115 : f32 to vector<1x32xf32>
    %408 = vector.extract_strided_slice %390 {offsets = [0, 0], sizes = [1, 1], strides = [1, 1]} : vector<8x1xf32> to vector<1x1xf32>
    %409 = vector.extract_strided_slice %61 {offsets = [0, 0], sizes = [1, 32], strides = [1, 1]} : vector<2x32xf32> to vector<1x32xf32>
    %410 = vector.broadcast %408 : vector<1x1xf32> to vector<1x32xf32>
    %411 = arith.mulf %410, %409 : vector<1x32xf32>
    %412 = arith.addf %407, %411 : vector<1x32xf32>
    %413 = vector.extract_strided_slice %390 {offsets = [1, 0], sizes = [1, 1], strides = [1, 1]} : vector<8x1xf32> to vector<1x1xf32>
    %414 = vector.extract_strided_slice %101 {offsets = [0, 0], sizes = [1, 32], strides = [1, 1]} : vector<2x32xf32> to vector<1x32xf32>
    %415 = vector.broadcast %413 : vector<1x1xf32> to vector<1x32xf32>
    %416 = arith.mulf %415, %414 : vector<1x32xf32>
    %417 = arith.addf %412, %416 : vector<1x32xf32>
    %418 = vector.extract_strided_slice %390 {offsets = [2, 0], sizes = [1, 1], strides = [1, 1]} : vector<8x1xf32> to vector<1x1xf32>
    %419 = vector.extract_strided_slice %141 {offsets = [0, 0], sizes = [1, 32], strides = [1, 1]} : vector<2x32xf32> to vector<1x32xf32>
    %420 = vector.broadcast %418 : vector<1x1xf32> to vector<1x32xf32>
    %421 = arith.mulf %420, %419 : vector<1x32xf32>
    %422 = arith.addf %417, %421 : vector<1x32xf32>
    %423 = vector.extract_strided_slice %390 {offsets = [3, 0], sizes = [1, 1], strides = [1, 1]} : vector<8x1xf32> to vector<1x1xf32>
    %424 = vector.extract_strided_slice %181 {offsets = [0, 0], sizes = [1, 32], strides = [1, 1]} : vector<2x32xf32> to vector<1x32xf32>
    %425 = vector.broadcast %423 : vector<1x1xf32> to vector<1x32xf32>
    %426 = arith.mulf %425, %424 : vector<1x32xf32>
    %427 = arith.addf %422, %426 : vector<1x32xf32>
    %428 = vector.extract_strided_slice %390 {offsets = [4, 0], sizes = [1, 1], strides = [1, 1]} : vector<8x1xf32> to vector<1x1xf32>
    %429 = vector.extract_strided_slice %221 {offsets = [0, 0], sizes = [1, 32], strides = [1, 1]} : vector<2x32xf32> to vector<1x32xf32>
    %430 = vector.broadcast %428 : vector<1x1xf32> to vector<1x32xf32>
    %431 = arith.mulf %430, %429 : vector<1x32xf32>
    %432 = arith.addf %427, %431 : vector<1x32xf32>
    %433 = vector.extract_strided_slice %390 {offsets = [5, 0], sizes = [1, 1], strides = [1, 1]} : vector<8x1xf32> to vector<1x1xf32>
    %434 = vector.extract_strided_slice %261 {offsets = [0, 0], sizes = [1, 32], strides = [1, 1]} : vector<2x32xf32> to vector<1x32xf32>
    %435 = vector.broadcast %433 : vector<1x1xf32> to vector<1x32xf32>
    %436 = arith.mulf %435, %434 : vector<1x32xf32>
    %437 = arith.addf %432, %436 : vector<1x32xf32>
    %438 = vector.extract_strided_slice %390 {offsets = [6, 0], sizes = [1, 1], strides = [1, 1]} : vector<8x1xf32> to vector<1x1xf32>
    %439 = vector.extract_strided_slice %301 {offsets = [0, 0], sizes = [1, 32], strides = [1, 1]} : vector<2x32xf32> to vector<1x32xf32>
    %440 = vector.broadcast %438 : vector<1x1xf32> to vector<1x32xf32>
    %441 = arith.mulf %440, %439 : vector<1x32xf32>
    %442 = arith.addf %437, %441 : vector<1x32xf32>
    %443 = vector.extract_strided_slice %390 {offsets = [7, 0], sizes = [1, 1], strides = [1, 1]} : vector<8x1xf32> to vector<1x1xf32>
    %444 = vector.extract_strided_slice %341 {offsets = [0, 0], sizes = [1, 32], strides = [1, 1]} : vector<2x32xf32> to vector<1x32xf32>
    %445 = vector.broadcast %443 : vector<1x1xf32> to vector<1x32xf32>
    %446 = arith.mulf %445, %444 : vector<1x32xf32>
    %447 = arith.addf %442, %446 : vector<1x32xf32>
    %cst_116 = arith.constant 0.000000e+00 : f32
    %448 = vector.broadcast %cst_116 : f32 to vector<1x32xf32>
    %449 = vector.extract_strided_slice %406 {offsets = [0, 0], sizes = [1, 1], strides = [1, 1]} : vector<8x1xf32> to vector<1x1xf32>
    %450 = vector.extract_strided_slice %61 {offsets = [1, 0], sizes = [1, 32], strides = [1, 1]} : vector<2x32xf32> to vector<1x32xf32>
    %451 = vector.broadcast %449 : vector<1x1xf32> to vector<1x32xf32>
    %452 = arith.mulf %451, %450 : vector<1x32xf32>
    %453 = arith.addf %448, %452 : vector<1x32xf32>
    %454 = vector.extract_strided_slice %406 {offsets = [1, 0], sizes = [1, 1], strides = [1, 1]} : vector<8x1xf32> to vector<1x1xf32>
    %455 = vector.extract_strided_slice %101 {offsets = [1, 0], sizes = [1, 32], strides = [1, 1]} : vector<2x32xf32> to vector<1x32xf32>
    %456 = vector.broadcast %454 : vector<1x1xf32> to vector<1x32xf32>
    %457 = arith.mulf %456, %455 : vector<1x32xf32>
    %458 = arith.addf %453, %457 : vector<1x32xf32>
    %459 = vector.extract_strided_slice %406 {offsets = [2, 0], sizes = [1, 1], strides = [1, 1]} : vector<8x1xf32> to vector<1x1xf32>
    %460 = vector.extract_strided_slice %141 {offsets = [1, 0], sizes = [1, 32], strides = [1, 1]} : vector<2x32xf32> to vector<1x32xf32>
    %461 = vector.broadcast %459 : vector<1x1xf32> to vector<1x32xf32>
    %462 = arith.mulf %461, %460 : vector<1x32xf32>
    %463 = arith.addf %458, %462 : vector<1x32xf32>
    %464 = vector.extract_strided_slice %406 {offsets = [3, 0], sizes = [1, 1], strides = [1, 1]} : vector<8x1xf32> to vector<1x1xf32>
    %465 = vector.extract_strided_slice %181 {offsets = [1, 0], sizes = [1, 32], strides = [1, 1]} : vector<2x32xf32> to vector<1x32xf32>
    %466 = vector.broadcast %464 : vector<1x1xf32> to vector<1x32xf32>
    %467 = arith.mulf %466, %465 : vector<1x32xf32>
    %468 = arith.addf %463, %467 : vector<1x32xf32>
    %469 = vector.extract_strided_slice %406 {offsets = [4, 0], sizes = [1, 1], strides = [1, 1]} : vector<8x1xf32> to vector<1x1xf32>
    %470 = vector.extract_strided_slice %221 {offsets = [1, 0], sizes = [1, 32], strides = [1, 1]} : vector<2x32xf32> to vector<1x32xf32>
    %471 = vector.broadcast %469 : vector<1x1xf32> to vector<1x32xf32>
    %472 = arith.mulf %471, %470 : vector<1x32xf32>
    %473 = arith.addf %468, %472 : vector<1x32xf32>
    %474 = vector.extract_strided_slice %406 {offsets = [5, 0], sizes = [1, 1], strides = [1, 1]} : vector<8x1xf32> to vector<1x1xf32>
    %475 = vector.extract_strided_slice %261 {offsets = [1, 0], sizes = [1, 32], strides = [1, 1]} : vector<2x32xf32> to vector<1x32xf32>
    %476 = vector.broadcast %474 : vector<1x1xf32> to vector<1x32xf32>
    %477 = arith.mulf %476, %475 : vector<1x32xf32>
    %478 = arith.addf %473, %477 : vector<1x32xf32>
    %479 = vector.extract_strided_slice %406 {offsets = [6, 0], sizes = [1, 1], strides = [1, 1]} : vector<8x1xf32> to vector<1x1xf32>
    %480 = vector.extract_strided_slice %301 {offsets = [1, 0], sizes = [1, 32], strides = [1, 1]} : vector<2x32xf32> to vector<1x32xf32>
    %481 = vector.broadcast %479 : vector<1x1xf32> to vector<1x32xf32>
    %482 = arith.mulf %481, %480 : vector<1x32xf32>
    %483 = arith.addf %478, %482 : vector<1x32xf32>
    %484 = vector.extract_strided_slice %406 {offsets = [7, 0], sizes = [1, 1], strides = [1, 1]} : vector<8x1xf32> to vector<1x1xf32>
    %485 = vector.extract_strided_slice %341 {offsets = [1, 0], sizes = [1, 32], strides = [1, 1]} : vector<2x32xf32> to vector<1x32xf32>
    %486 = vector.broadcast %484 : vector<1x1xf32> to vector<1x32xf32>
    %487 = arith.mulf %486, %485 : vector<1x32xf32>
    %488 = arith.addf %483, %487 : vector<1x32xf32>
    %489 = tpu.concatenate %447, %488 in 0 : vector<1x32xf32>, vector<1x32xf32> -> vector<2x32xf32>
    %c0_117 = arith.constant 0 : index
    %c0_118 = arith.constant 0 : index
    %490 = vector.load %arg9[%c0_117, %c0_118] : memref<2x32xf32, #tpu.memory_space<vmem>>, vector<2x32xf32>
    tpu.vector_store %arg9[%c0_117, %c0_118], %489 {strides = array<i32>} : memref<2x32xf32, #tpu.memory_space<vmem>>, vector<2x32xf32>,
    %c0_119 = arith.constant 0 : index
    %c0_120 = arith.constant 0 : index
    %491 = vector.load %arg6[%c0_119, %c0_120] : memref<32x4xf32, #tpu.memory_space<vmem>>, vector<32x4xf32>
    %cst_121 = arith.constant dense<0.000000e+00> : vector<2x4xf32>
    %492 = tpu.matmul %489, %491, %cst_121 {dimension_numbers = #tpu.dot_dimension_numbers<[1], [0], [0], [1], [0, 0, 1, 1], [], []>} : vector<2x32xf32>, vector<32x4xf32>, vector<2x4xf32> -> vector<2x4xf32>
    %c0_122 = arith.constant 0 : index
    %c0_123 = arith.constant 0 : index
    %493 = vector.load %arg7[%c0_122, %c0_123] : memref<1x4xf32, #tpu.memory_space<vmem>>, vector<1x4xf32>
    %494 = vector.broadcast %493 : vector<1x4xf32> to vector<2x4xf32>
    %495 = arith.addf %492, %494 : vector<2x4xf32>
    %c0_124 = arith.constant 0 : index
    %c0_125 = arith.constant 0 : index
    %496 = vector.load %arg8[%c0_124, %c0_125] : memref<2x4xf32, #tpu.memory_space<vmem>>, vector<2x4xf32>
    tpu.vector_store %arg8[%c0_124, %c0_125], %495 {strides = array<i32>} : memref<2x4xf32, #tpu.memory_space<vmem>>, vector<2x4xf32>,
    return
  }
}

</mosaic_0001>

<llo_original>
// kernel: rnn_attention_forward.1
$region0: #{rnn_attention_forward.1}
  #allocation0 [shape = 'u32[]', space=smem, size = 0x4, offset = 0x4, fixed_abs, tag = 'smem constant byte address 0x4 - core index']
  #allocation1 [shape = 'u32[144,128]{1,0:T(1,128)}', space=vmem, size = 0x12000, scoped, tag = 'internal scratch']
  %s0 = inlined_call_operand.vmem [shape: f32[16,16], index: 0, kind: input, shape index: {}]
  %s1 = inlined_call_operand.vmem [shape: s32[2], index: 1, kind: input, shape index: {}]
  %s2 = inlined_call_operand.vmem [shape: f32[16,128], index: 2, kind: input, shape index: {}]
  %s3 = inlined_call_operand.vmem [shape: f32[32,128], index: 3, kind: input, shape index: {}]
  %s4 = inlined_call_operand.vmem [shape: f32[1,128], index: 4, kind: input, shape index: {}]
  %s5 = inlined_call_operand.vmem [shape: f32[1,32], index: 5, kind: input, shape index: {}]
  %s6 = inlined_call_operand.vmem [shape: f32[32,4], index: 6, kind: input, shape index: {}]
  %s7 = inlined_call_operand.vmem [shape: f32[1,4], index: 7, kind: input, shape index: {}]
  %s8 = inlined_call_operand.hbm [shape: f32[2,4], index: 8, kind: output, shape index: {0}]
  %s9 = inlined_call_operand.hbm [shape: f32[2,32], index: 9, kind: output, shape index: {1}]
  %10 = xla_tuple %s8, %s9
  %s11 = sld [smem:[#allocation0]]
  $region54: #{rnn_attention_forward.1} parent=0
    _
  %s13 = ssub.s32 1, %s11
  %s14 = scalar_select 0, %s13, %s11
  $region1: #{rnn_attention_forward.1} parent=0
    #allocation2 [shape = 'u8[512]{0}', space=smem, size = 0x200, scoped, tag = 'input window, operand 1, single buffered']
    #allocation3 [shape = 's32[1]{0}', space=sflag, size = 0x4, scoped, tag = 'scoped memory for rnn_attention_forward.1']
    #allocation4 [shape = 's32[1]{0}', space=sflag, size = 0x4, scoped, tag = 'scoped memory for rnn_attention_forward.1']
    #allocation5 [shape = 'u8[1024]{0}', space=vmem, size = 0x400, scoped, tag = 'output window, operand 0, single buffered']
    #allocation6 [shape = 'u8[1024]{0}', space=vmem, size = 0x400, scoped, tag = 'output window, operand 1, single buffered']
    #allocation7 [shape = 's32[1]{0}', space=sflag, size = 0x4, scoped, tag = 'scoped memory for rnn_attention_forward.1']
    %15 = vsyncpa [#allocation4], 0
    %16 = vsyncpa [#allocation3], 0
    %17 = vsyncpa [#allocation7], 0
    // Predicated region
    $region2: #{rnn_attention_forward.1} parent=1 // pred_check
      _
    $region3: #{rnn_attention_forward.1} parent=1 // pred_check_branch
      %19 = sbr.rel (0) target = $region5
    $region4: #{rnn_attention_forward.1} parent=1 // pred_region
      _
    $region5: #{rnn_attention_forward.1} parent=1 // pred_fallthru
      _
    // Predicated region
    $region6: #{rnn_attention_forward.1} parent=1 // pred_check
      _
    $region7: #{rnn_attention_forward.1} parent=1 // pred_check_branch
      %21 = sbr.rel (0) target = $region9
    $region8: #{rnn_attention_forward.1} parent=1 // pred_region
      %s23 = ssub.s32 16, 16
      %24 = vsyncadd [#allocation4], %s23
      %s26 = sshll.u32 %s1, 4
      %s27 = int_to_ptr.vmem [resolvable:$true] %s26
      %29 = dma.vmem_to_smem %s27, 16, [#allocation2], [#allocation4]
    $region9: #{rnn_attention_forward.1} parent=1 // pred_fallthru
      _
    // Predicated region
    $region10: #{rnn_attention_forward.1} parent=1 // pred_check
      _
    $region11: #{rnn_attention_forward.1} parent=1 // pred_check_branch
      %31 = sbr.rel (0) target = $region13
    $region12: #{rnn_attention_forward.1} parent=1 // pred_region
      _
    $region13: #{rnn_attention_forward.1} parent=1 // pred_fallthru
      _
    // Predicated region
    $region14: #{rnn_attention_forward.1} parent=1 // pred_check
      _
    $region15: #{rnn_attention_forward.1} parent=1 // pred_check_branch
      %33 = sbr.rel (0) target = $region17
    $region16: #{rnn_attention_forward.1} parent=1 // pred_region
      _
    $region17: #{rnn_attention_forward.1} parent=1 // pred_fallthru
      _
    // Predicated region
    $region18: #{rnn_attention_forward.1} parent=1 // pred_check
      _
    $region19: #{rnn_attention_forward.1} parent=1 // pred_check_branch
      %35 = sbr.rel (0) target = $region21
    $region20: #{rnn_attention_forward.1} parent=1 // pred_region
      _
    $region21: #{rnn_attention_forward.1} parent=1 // pred_fallthru
      _
    // Predicated region
    $region22: #{rnn_attention_forward.1} parent=1 // pred_check
      _
    $region23: #{rnn_attention_forward.1} parent=1 // pred_check_branch
      %37 = sbr.rel (0) target = $region25
    $region24: #{rnn_attention_forward.1} parent=1 // pred_region
      _
    $region25: #{rnn_attention_forward.1} parent=1 // pred_fallthru
      _
    // Predicated region
    $region26: #{rnn_attention_forward.1} parent=1 // pred_check
      _
    $region27: #{rnn_attention_forward.1} parent=1 // pred_check_branch
      %39 = sbr.rel (0) target = $region29
    $region28: #{rnn_attention_forward.1} parent=1 // pred_region
      _
    $region29: #{rnn_attention_forward.1} parent=1 // pred_fallthru
      _
    // Predicated region
    $region30: #{rnn_attention_forward.1} parent=1 // pred_check
      _
    $region31: #{rnn_attention_forward.1} parent=1 // pred_check_branch
      %41 = sbr.rel (0) target = $region33
    $region32: #{rnn_attention_forward.1} parent=1 // pred_region
      _
    $region33: #{rnn_attention_forward.1} parent=1 // pred_fallthru
      _
    // Predicated region
    $region34: #{rnn_attention_forward.1} parent=1 // pred_check
      _
    $region35: #{rnn_attention_forward.1} parent=1 // pred_check_branch
      %43 = sbr.rel (0) target = $region37
    $region36: #{rnn_attention_forward.1} parent=1 // pred_region
      %44 = dma.done [#allocation4], 16
    $region37: #{rnn_attention_forward.1} parent=1 // pred_fallthru
      _
    %45 = sfence
    %v46 = vld [vmem:[%s3] sm:$0xff]
    %v47 = vld [vmem:[%s3 + $0x8] sm:$0xff]
    %v48 = vld [vmem:[%s3 + $0x10] sm:$0xff]
    %v49 = vld [vmem:[%s3 + $0x18] sm:$0xff]
    %v50 = vld [vmem:[%s5] sm:$0x1]
    %v51 = vld [vmem:[%s0] sm:$0xff]
    %v52 = vld [vmem:[%s0 + $0x8] sm:$0xff]
    %v53 = vld [vmem:[%s2] sm:$0xff]
    %v54 = vld [vmem:[%s2 + $0x8] sm:$0xff]
    %v55 = vld [vmem:[%s4] sm:$0x1]
    %v57 = vlaneseq
    %v58 = vshrl.u32 %v57, 7
    %v59 = vsub.s32 0, %v58
    %v60 = vrot.slane %v55, %v59
    %vm62 = vcmask 130048
    %v64 = vsel %vm62, %v51, 0
    %v67 = vsel %vm62, %v52, 0
    %69 = vmatprep.subr.mxu0 0.0
    %70 = vmatpush1.msra.mxu0 0.0
    %71 = vmatprep.subr.mxu0 0.0
    %72 = vmatpush1.msra.mxu0 0.0
    %73 = vmatprep.subr.mxu0 0.0
    %74 = vmatpush1.msra.mxu0 0.0
    %75 = vmatprep.subr.mxu0 0.0
    %76 = vmatpush1.msra.mxu0 0.0
    %77 = vmatprep.subr.mxu0 0.0
    %78 = vmatpush1.msra.mxu0 0.0
    %79 = vmatprep.subr.mxu0 0.0
    %80 = vmatpush1.msra.mxu0 0.0
    %81 = vmatprep.subr.mxu0 0.0
    %82 = vmatpush1.msra.mxu0 0.0
    %83 = vmatprep.subr.mxu0 0.0
    %84 = vmatpush1.msra.mxu0 0.0
    %85 = vmatprep.subr.mxu0 0.0
    %86 = vmatpush1.msra.mxu0 0.0
    %87 = vmatprep.subr.mxu0 0.0
    %88 = vmatpush1.msra.mxu0 0.0
    %89 = vmatprep.subr.mxu0 0.0
    %90 = vmatpush1.msra.mxu0 0.0
    %91 = vmatprep.subr.mxu0 0.0
    %92 = vmatpush1.msra.mxu0 0.0
    %93 = vmatprep.subr.mxu0 0.0
    %94 = vmatpush1.msra.mxu0 0.0
    %95 = vmatprep.subr.mxu0 0.0
    %96 = vmatpush1.msra.mxu0 0.0
    %97 = vmatprep.subr.mxu0 0.0
    %98 = vmatpush1.msra.mxu0 %v54
    %99 = vmatprep.subr.mxu0 0.0
    %100 = vmatpush1.msra.mxu0 %v53
    %101 = vmatprep.subr.mxu0 0.0
    %102 = vmatpush2.msra.mxu0 0.0
    %103 = vmatprep.subr.mxu0 0.0
    %104 = vmatpush2.msra.mxu0 0.0
    %105 = vmatprep.subr.mxu0 0.0
    %106 = vmatpush2.msra.mxu0 0.0
    %107 = vmatprep.subr.mxu0 0.0
    %108 = vmatpush2.msra.mxu0 0.0
    %109 = vmatprep.subr.mxu0 0.0
    %110 = vmatpush2.msra.mxu0 0.0
    %111 = vmatprep.subr.mxu0 0.0
    %112 = vmatpush2.msra.mxu0 0.0
    %113 = vmatprep.subr.mxu0 0.0
    %114 = vmatpush2.msra.mxu0 0.0
    %115 = vmatprep.subr.mxu0 0.0
    %116 = vmatpush2.msra.mxu0 0.0
    %117 = vmatprep.subr.mxu0 0.0
    %118 = vmatpush2.msra.mxu0 0.0
    %119 = vmatprep.subr.mxu0 0.0
    %120 = vmatpush2.msra.mxu0 0.0
    %121 = vmatprep.subr.mxu0 0.0
    %122 = vmatpush2.msra.mxu0 0.0
    %123 = vmatprep.subr.mxu0 0.0
    %124 = vmatpush2.msra.mxu0 0.0
    %125 = vmatprep.subr.mxu0 0.0
    %126 = vmatpush2.msra.mxu0 0.0
    %127 = vmatprep.subr.mxu0 0.0
    %128 = vmatpush2.msra.mxu0 0.0
    %129 = vmatprep.subr.mxu0 0.0
    %130 = vmatpush2.msra.mxu0 0.0
    %131 = vmatprep.subr.mxu0 0.0
    %132 = vmatpush2.msra.mxu0 0.0
    %133 = vmatprep.mubr.f32.mxu0 0.0
    %134 = vmatmul.mubr.f32.gmra.mxu0 %v64
    %v135 = vpop.f32.mrf.mxu0
    %v136 = vadd.f32 %v60, %v135
    %v137 = vpop.f32.mrf.mxu0
    %138 = vmatprep.mubr.f32.mxu0 0.0
    %139 = vmatmul.mubr.f32.gmra.mxu0 %v67
    %v140 = vpop.f32.mrf.mxu0
    %v141 = vadd.f32 %v60, %v140
    %v142 = vpop.f32.mrf.mxu0
    %143 = vdwg.mxu0
    %v144 = vlaneseq
    %v145 = vshrl.u32 %v144, 7
    %vm146 = vcmp.eq.s32.totalorder %v145, 0
    %s147 = sld [smem:[#allocation2]]
    %v148 = vstv %s147
    %v149 = vsel %vm146, %v148, 0
    %vm150 = vcmp.eq.s32.totalorder %v145, 1
    %s151 = sld [smem:[#allocation2 + $0x1]]
    %v152 = vstv %s151
    %v153 = vsel %vm150, %v152, %v149
    %vm154 = vcmask 261120
    %v156 = vsel %vm154, 0.0, 0
    %158 = vmatprep.subr.mxu0 0.0
    %159 = vmatpush1.msra.mxu0 0.0
    %160 = vmatprep.subr.mxu0 0.0
    %161 = vmatpush1.msra.mxu0 0.0
    %162 = vmatprep.subr.mxu0 0.0
    %163 = vmatpush1.msra.mxu0 0.0
    %164 = vmatprep.subr.mxu0 0.0
    %165 = vmatpush1.msra.mxu0 0.0
    %166 = vmatprep.subr.mxu0 0.0
    %167 = vmatpush1.msra.mxu0 0.0
    %168 = vmatprep.subr.mxu0 0.0
    %169 = vmatpush1.msra.mxu0 0.0
    %170 = vmatprep.subr.mxu0 0.0
    %171 = vmatpush1.msra.mxu0 0.0
    %172 = vmatprep.subr.mxu0 0.0
    %173 = vmatpush1.msra.mxu0 0.0
    %174 = vmatprep.subr.mxu0 0.0
    %175 = vmatpush1.msra.mxu0 0.0
    %176 = vmatprep.subr.mxu0 0.0
    %177 = vmatpush1.msra.mxu0 0.0
    %178 = vmatprep.subr.mxu0 0.0
    %179 = vmatpush1.msra.mxu0 0.0
    %180 = vmatprep.subr.mxu0 0.0
    %181 = vmatpush1.msra.mxu0 0.0
    %182 = vmatprep.subr.mxu0 0.0
    %183 = vmatpush1.msra.mxu0 %v49
    %184 = vmatprep.subr.mxu0 0.0
    %185 = vmatpush1.msra.mxu0 %v48
    %186 = vmatprep.subr.mxu0 0.0
    %187 = vmatpush1.msra.mxu0 %v47
    %188 = vmatprep.subr.mxu0 0.0
    %189 = vmatpush1.msra.mxu0 %v46
    %190 = vmatprep.subr.mxu0 0.0
    %191 = vmatpush2.msra.mxu0 0.0
    %192 = vmatprep.subr.mxu0 0.0
    %193 = vmatpush2.msra.mxu0 0.0
    %194 = vmatprep.subr.mxu0 0.0
    %195 = vmatpush2.msra.mxu0 0.0
    %196 = vmatprep.subr.mxu0 0.0
    %197 = vmatpush2.msra.mxu0 0.0
    %198 = vmatprep.subr.mxu0 0.0
    %199 = vmatpush2.msra.mxu0 0.0
    %200 = vmatprep.subr.mxu0 0.0
    %201 = vmatpush2.msra.mxu0 0.0
    %202 = vmatprep.subr.mxu0 0.0
    %203 = vmatpush2.msra.mxu0 0.0
    %204 = vmatprep.subr.mxu0 0.0
    %205 = vmatpush2.msra.mxu0 0.0
    %206 = vmatprep.subr.mxu0 0.0
    %207 = vmatpush2.msra.mxu0 0.0
    %208 = vmatprep.subr.mxu0 0.0
    %209 = vmatpush2.msra.mxu0 0.0
    %210 = vmatprep.subr.mxu0 0.0
    %211 = vmatpush2.msra.mxu0 0.0
    %212 = vmatprep.subr.mxu0 0.0
    %213 = vmatpush2.msra.mxu0 0.0
    %214 = vmatprep.subr.mxu0 0.0
    %215 = vmatpush2.msra.mxu0 0.0
    %216 = vmatprep.subr.mxu0 0.0
    %217 = vmatpush2.msra.mxu0 0.0
    %218 = vmatprep.subr.mxu0 0.0
    %219 = vmatpush2.msra.mxu0 0.0
    %220 = vmatprep.subr.mxu0 0.0
    %221 = vmatpush2.msra.mxu0 0.0
    %222 = vmatprep.mubr.f32.mxu0 0.0
    %223 = vmatmul.mubr.f32.gmra.mxu0 %v156
    %v224 = vpop.f32.mrf.mxu0
    %v225 = vadd.f32 %v136, %v224
    %v226 = vpop.f32.mrf.mxu0
    %227 = vdwg.mxu0
    %v228 = vmul.f32 %v225, 0.5
    %v229 = vtanh.pop %v228
    %v230 = vmul.f32 %v229, 0.5
    %v231 = vadd.f32 %v230, 0.5
    %v232 = vtanh.pop %v225
    %v233 = vmul.f32 %v231, 0.0
    %235 = vrot.lane.b32.xlu0 %v232, 64
    %v236 = vpop.permute.xlu0 %235
    %v238 = vmul.f32 %v231, %v236
    %240 = vrot.lane.b32.xlu0 %v238, 32
    %v241 = vpop.permute.xlu0 %240
    %v243 = vadd.f32 %v233, %v241
    %v244 = vtanh.pop %v243
    %246 = vrot.lane.b32.xlu0 %v244, 64
    %v247 = vpop.permute.xlu0 %246
    %v249 = vmul.f32 %v231, %v247
    %vm250 = vcmp.gt.s32.totalorder %v153, 0
    %v251 = vsel %vm250, 1, 0
    %vm252 = vcmp.eq.s32.totalorder %v251, 1
    %v253 = vsel %vm252, %v249, 0.0
    %255 = vrot.lane.b32.xlu0 %v249, 32
    %v256 = vpop.permute.xlu0 %255
    %v258 = vrot.slane %v136, 2
    %v260 = vsel %vm154, %v256, 0
    %262 = vmatprep.subr.mxu0 0.0
    %263 = vmatpush1.msra.mxu0 0.0
    %264 = vmatprep.subr.mxu0 0.0
    %265 = vmatpush1.msra.mxu0 0.0
    %266 = vmatprep.subr.mxu0 0.0
    %267 = vmatpush1.msra.mxu0 0.0
    %268 = vmatprep.subr.mxu0 0.0
    %269 = vmatpush1.msra.mxu0 0.0
    %270 = vmatprep.subr.mxu0 0.0
    %271 = vmatpush1.msra.mxu0 0.0
    %272 = vmatprep.subr.mxu0 0.0
    %273 = vmatpush1.msra.mxu0 0.0
    %274 = vmatprep.subr.mxu0 0.0
    %275 = vmatpush1.msra.mxu0 0.0
    %276 = vmatprep.subr.mxu0 0.0
    %277 = vmatpush1.msra.mxu0 0.0
    %278 = vmatprep.subr.mxu0 0.0
    %279 = vmatpush1.msra.mxu0 0.0
    %280 = vmatprep.subr.mxu0 0.0
    %281 = vmatpush1.msra.mxu0 0.0
    %282 = vmatprep.subr.mxu0 0.0
    %283 = vmatpush1.msra.mxu0 0.0
    %284 = vmatprep.subr.mxu0 0.0
    %285 = vmatpush1.msra.mxu0 0.0
    %286 = vmatprep.subr.mxu0 0.0
    %287 = vmatpush1.msra.mxu0 %v49
    %288 = vmatprep.subr.mxu0 0.0
    %289 = vmatpush1.msra.mxu0 %v48
    %290 = vmatprep.subr.mxu0 0.0
    %291 = vmatpush1.msra.mxu0 %v47
    %292 = vmatprep.subr.mxu0 0.0
    %293 = vmatpush1.msra.mxu0 %v46
    %294 = vmatprep.subr.mxu0 0.0
    %295 = vmatpush2.msra.mxu0 0.0
    %296 = vmatprep.subr.mxu0 0.0
    %297 = vmatpush2.msra.mxu0 0.0
    %298 = vmatprep.subr.mxu0 0.0
    %299 = vmatpush2.msra.mxu0 0.0
    %300 = vmatprep.subr.mxu0 0.0
    %301 = vmatpush2.msra.mxu0 0.0
    %302 = vmatprep.subr.mxu0 0.0
    %303 = vmatpush2.msra.mxu0 0.0
    %304 = vmatprep.subr.mxu0 0.0
    %305 = vmatpush2.msra.mxu0 0.0
    %306 = vmatprep.subr.mxu0 0.0
    %307 = vmatpush2.msra.mxu0 0.0
    %308 = vmatprep.subr.mxu0 0.0
    %309 = vmatpush2.msra.mxu0 0.0
    %310 = vmatprep.subr.mxu0 0.0
    %311 = vmatpush2.msra.mxu0 0.0
    %312 = vmatprep.subr.mxu0 0.0
    %313 = vmatpush2.msra.mxu0 0.0
    %314 = vmatprep.subr.mxu0 0.0
    %315 = vmatpush2.msra.mxu0 0.0
    %316 = vmatprep.subr.mxu0 0.0
    %317 = vmatpush2.msra.mxu0 0.0
    %318 = vmatprep.subr.mxu0 0.0
    %319 = vmatpush2.msra.mxu0 0.0
    %320 = vmatprep.subr.mxu0 0.0
    %321 = vmatpush2.msra.mxu0 0.0
    %322 = vmatprep.subr.mxu0 0.0
    %323 = vmatpush2.msra.mxu0 0.0
    %324 = vmatprep.subr.mxu0 0.0
    %325 = vmatpush2.msra.mxu0 0.0
    %326 = vmatprep.mubr.f32.mxu0 0.0
    %327 = vmatmul.mubr.f32.gmra.mxu0 %v260
    %v328 = vpop.f32.mrf.mxu0
    %v329 = vadd.f32 %v258, %v328
    %v330 = vpop.f32.mrf.mxu0
    %331 = vdwg.mxu0
    %v332 = vmul.f32 %v329, 0.5
    %v333 = vtanh.pop %v332
    %v334 = vmul.f32 %v333, 0.5
    %v335 = vadd.f32 %v334, 0.5
    %v336 = vtanh.pop %v329
    %v337 = vmul.f32 %v335, %v243
    %339 = vrot.lane.b32.xlu0 %v336, 64
    %v340 = vpop.permute.xlu0 %339
    %v342 = vmul.f32 %v335, %v340
    %344 = vrot.lane.b32.xlu0 %v342, 32
    %v345 = vpop.permute.xlu0 %344
    %v347 = vadd.f32 %v337, %v345
    %v348 = vtanh.pop %v347
    %350 = vrot.lane.b32.xlu0 %v348, 64
    %v351 = vpop.permute.xlu0 %350
    %v353 = vmul.f32 %v335, %v351
    %vm354 = vcmp.gt.s32.totalorder %v153, 1
    %v355 = vsel %vm354, 1, 0
    %vm356 = vcmp.eq.s32.totalorder %v355, 1
    %v357 = vsel %vm356, %v353, 0.0
    %359 = vrot.lane.b32.xlu0 %v353, 32
    %v360 = vpop.permute.xlu0 %359
    %v361 = vrot.slane %v136, 4
    %v363 = vsel %vm154, %v360, 0
    %365 = vmatprep.subr.mxu0 0.0
    %366 = vmatpush1.msra.mxu0 0.0
    %367 = vmatprep.subr.mxu0 0.0
    %368 = vmatpush1.msra.mxu0 0.0
    %369 = vmatprep.subr.mxu0 0.0
    %370 = vmatpush1.msra.mxu0 0.0
    %371 = vmatprep.subr.mxu0 0.0
    %372 = vmatpush1.msra.mxu0 0.0
    %373 = vmatprep.subr.mxu0 0.0
    %374 = vmatpush1.msra.mxu0 0.0
    %375 = vmatprep.subr.mxu0 0.0
    %376 = vmatpush1.msra.mxu0 0.0
    %377 = vmatprep.subr.mxu0 0.0
    %378 = vmatpush1.msra.mxu0 0.0
    %379 = vmatprep.subr.mxu0 0.0
    %380 = vmatpush1.msra.mxu0 0.0
    %381 = vmatprep.subr.mxu0 0.0
    %382 = vmatpush1.msra.mxu0 0.0
    %383 = vmatprep.subr.mxu0 0.0
    %384 = vmatpush1.msra.mxu0 0.0
    %385 = vmatprep.subr.mxu0 0.0
    %386 = vmatpush1.msra.mxu0 0.0
    %387 = vmatprep.subr.mxu0 0.0
    %388 = vmatpush1.msra.mxu0 0.0
    %389 = vmatprep.subr.mxu0 0.0
    %390 = vmatpush1.msra.mxu0 %v49
    %391 = vmatprep.subr.mxu0 0.0
    %392 = vmatpush1.msra.mxu0 %v48
    %393 = vmatprep.subr.mxu0 0.0
    %394 = vmatpush1.msra.mxu0 %v47
    %395 = vmatprep.subr.mxu0 0.0
    %396 = vmatpush1.msra.mxu0 %v46
    %397 = vmatprep.subr.mxu0 0.0
    %398 = vmatpush2.msra.mxu0 0.0
    %399 = vmatprep.subr.mxu0 0.0
    %400 = vmatpush2.msra.mxu0 0.0
    %401 = vmatprep.subr.mxu0 0.0
    %402 = vmatpush2.msra.mxu0 0.0
    %403 = vmatprep.subr.mxu0 0.0
    %404 = vmatpush2.msra.mxu0 0.0
    %405 = vmatprep.subr.mxu0 0.0
    %406 = vmatpush2.msra.mxu0 0.0
    %407 = vmatprep.subr.mxu0 0.0
    %408 = vmatpush2.msra.mxu0 0.0
    %409 = vmatprep.subr.mxu0 0.0
    %410 = vmatpush2.msra.mxu0 0.0
    %411 = vmatprep.subr.mxu0 0.0
    %412 = vmatpush2.msra.mxu0 0.0
    %413 = vmatprep.subr.mxu0 0.0
    %414 = vmatpush2.msra.mxu0 0.0
    %415 = vmatprep.subr.mxu0 0.0
    %416 = vmatpush2.msra.mxu0 0.0
    %417 = vmatprep.subr.mxu0 0.0
    %418 = vmatpush2.msra.mxu0 0.0
    %419 = vmatprep.subr.mxu0 0.0
    %420 = vmatpush2.msra.mxu0 0.0
    %421 = vmatprep.subr.mxu0 0.0
    %422 = vmatpush2.msra.mxu0 0.0
    %423 = vmatprep.subr.mxu0 0.0
    %424 = vmatpush2.msra.mxu0 0.0
    %425 = vmatprep.subr.mxu0 0.0
    %426 = vmatpush2.msra.mxu0 0.0
    %427 = vmatprep.subr.mxu0 0.0
    %428 = vmatpush2.msra.mxu0 0.0
    %429 = vmatprep.mubr.f32.mxu0 0.0
    %430 = vmatmul.mubr.f32.gmra.mxu0 %v363
    %v431 = vpop.f32.mrf.mxu0
    %v432 = vadd.f32 %v361, %v431
    %v433 = vpop.f32.mrf.mxu0
    %434 = vdwg.mxu0
    %v435 = vmul.f32 %v432, 0.5
    %v436 = vtanh.pop %v435
    %v437 = vmul.f32 %v436, 0.5
    %v438 = vadd.f32 %v437, 0.5
    %v439 = vtanh.pop %v432
    %v440 = vmul.f32 %v438, %v347
    %442 = vrot.lane.b32.xlu0 %v439, 64
    %v443 = vpop.permute.xlu0 %442
    %v445 = vmul.f32 %v438, %v443
    %447 = vrot.lane.b32.xlu0 %v445, 32
    %v448 = vpop.permute.xlu0 %447
    %v450 = vadd.f32 %v440, %v448
    %v451 = vtanh.pop %v450
    %453 = vrot.lane.b32.xlu0 %v451, 64
    %v454 = vpop.permute.xlu0 %453
    %v456 = vmul.f32 %v438, %v454
    %vm457 = vcmp.gt.s32.totalorder %v153, 2
    %v458 = vsel %vm457, 1, 0
    %vm459 = vcmp.eq.s32.totalorder %v458, 1
    %v460 = vsel %vm459, %v456, 0.0
    %462 = vrot.lane.b32.xlu0 %v456, 32
    %v463 = vpop.permute.xlu0 %462
    %v464 = vrot.slane %v136, 6
    %v466 = vsel %vm154, %v463, 0
    %468 = vmatprep.subr.mxu0 0.0
    %469 = vmatpush1.msra.mxu0 0.0
    %470 = vmatprep.subr.mxu0 0.0
    %471 = vmatpush1.msra.mxu0 0.0
    %472 = vmatprep.subr.mxu0 0.0
    %473 = vmatpush1.msra.mxu0 0.0
    %474 = vmatprep.subr.mxu0 0.0
    %475 = vmatpush1.msra.mxu0 0.0
    %476 = vmatprep.subr.mxu0 0.0
    %477 = vmatpush1.msra.mxu0 0.0
    %478 = vmatprep.subr.mxu0 0.0
    %479 = vmatpush1.msra.mxu0 0.0
    %480 = vmatprep.subr.mxu0 0.0
    %481 = vmatpush1.msra.mxu0 0.0
    %482 = vmatprep.subr.mxu0 0.0
    %483 = vmatpush1.msra.mxu0 0.0
    %484 = vmatprep.subr.mxu0 0.0
    %485 = vmatpush1.msra.mxu0 0.0
    %486 = vmatprep.subr.mxu0 0.0
    %487 = vmatpush1.msra.mxu0 0.0
    %488 = vmatprep.subr.mxu0 0.0
    %489 = vmatpush1.msra.mxu0 0.0
    %490 = vmatprep.subr.mxu0 0.0
    %491 = vmatpush1.msra.mxu0 0.0
    %492 = vmatprep.subr.mxu0 0.0
    %493 = vmatpush1.msra.mxu0 %v49
    %494 = vmatprep.subr.mxu0 0.0
    %495 = vmatpush1.msra.mxu0 %v48
    %496 = vmatprep.subr.mxu0 0.0
    %497 = vmatpush1.msra.mxu0 %v47
    %498 = vmatprep.subr.mxu0 0.0
    %499 = vmatpush1.msra.mxu0 %v46
    %500 = vmatprep.subr.mxu0 0.0
    %501 = vmatpush2.msra.mxu0 0.0
    %502 = vmatprep.subr.mxu0 0.0
    %503 = vmatpush2.msra.mxu0 0.0
    %504 = vmatprep.subr.mxu0 0.0
    %505 = vmatpush2.msra.mxu0 0.0
    %506 = vmatprep.subr.mxu0 0.0
    %507 = vmatpush2.msra.mxu0 0.0
    %508 = vmatprep.subr.mxu0 0.0
    %509 = vmatpush2.msra.mxu0 0.0
    %510 = vmatprep.subr.mxu0 0.0
    %511 = vmatpush2.msra.mxu0 0.0
    %512 = vmatprep.subr.mxu0 0.0
    %513 = vmatpush2.msra.mxu0 0.0
    %514 = vmatprep.subr.mxu0 0.0
    %515 = vmatpush2.msra.mxu0 0.0
    %516 = vmatprep.subr.mxu0 0.0
    %517 = vmatpush2.msra.mxu0 0.0
    %518 = vmatprep.subr.mxu0 0.0
    %519 = vmatpush2.msra.mxu0 0.0
    %520 = vmatprep.subr.mxu0 0.0
    %521 = vmatpush2.msra.mxu0 0.0
    %522 = vmatprep.subr.mxu0 0.0
    %523 = vmatpush2.msra.mxu0 0.0
    %524 = vmatprep.subr.mxu0 0.0
    %525 = vmatpush2.msra.mxu0 0.0
    %526 = vmatprep.subr.mxu0 0.0
    %527 = vmatpush2.msra.mxu0 0.0
    %528 = vmatprep.subr.mxu0 0.0
    %529 = vmatpush2.msra.mxu0 0.0
    %530 = vmatprep.subr.mxu0 0.0
    %531 = vmatpush2.msra.mxu0 0.0
    %532 = vmatprep.mubr.f32.mxu0 0.0
    %533 = vmatmul.mubr.f32.gmra.mxu0 %v466
    %v534 = vpop.f32.mrf.mxu0
    %v535 = vadd.f32 %v464, %v534
    %v536 = vpop.f32.mrf.mxu0
    %537 = vdwg.mxu0
    %v538 = vmul.f32 %v535, 0.5
    %v539 = vtanh.pop %v538
    %v540 = vmul.f32 %v539, 0.5
    %v541 = vadd.f32 %v540, 0.5
    %v542 = vtanh.pop %v535
    %v543 = vmul.f32 %v541, %v450
    %545 = vrot.lane.b32.xlu0 %v542, 64
    %v546 = vpop.permute.xlu0 %545
    %v548 = vmul.f32 %v541, %v546
    %550 = vrot.lane.b32.xlu0 %v548, 32
    %v551 = vpop.permute.xlu0 %550
    %v553 = vadd.f32 %v543, %v551
    %v554 = vtanh.pop %v553
    %556 = vrot.lane.b32.xlu0 %v554, 64
    %v557 = vpop.permute.xlu0 %556
    %v559 = vmul.f32 %v541, %v557
    %vm560 = vcmp.gt.s32.totalorder %v153, 3
    %v561 = vsel %vm560, 1, 0
    %vm562 = vcmp.eq.s32.totalorder %v561, 1
    %v563 = vsel %vm562, %v559, 0.0
    %565 = vrot.lane.b32.xlu0 %v559, 32
    %v566 = vpop.permute.xlu0 %565
    %v567 = vsel %vm154, %v566, 0
    %569 = vmatprep.subr.mxu0 0.0
    %570 = vmatpush1.msra.mxu0 0.0
    %571 = vmatprep.subr.mxu0 0.0
    %572 = vmatpush1.msra.mxu0 0.0
    %573 = vmatprep.subr.mxu0 0.0
    %574 = vmatpush1.msra.mxu0 0.0
    %575 = vmatprep.subr.mxu0 0.0
    %576 = vmatpush1.msra.mxu0 0.0
    %577 = vmatprep.subr.mxu0 0.0
    %578 = vmatpush1.msra.mxu0 0.0
    %579 = vmatprep.subr.mxu0 0.0
    %580 = vmatpush1.msra.mxu0 0.0
    %581 = vmatprep.subr.mxu0 0.0
    %582 = vmatpush1.msra.mxu0 0.0
    %583 = vmatprep.subr.mxu0 0.0
    %584 = vmatpush1.msra.mxu0 0.0
    %585 = vmatprep.subr.mxu0 0.0
    %586 = vmatpush1.msra.mxu0 0.0
    %587 = vmatprep.subr.mxu0 0.0
    %588 = vmatpush1.msra.mxu0 0.0
    %589 = vmatprep.subr.mxu0 0.0
    %590 = vmatpush1.msra.mxu0 0.0
    %591 = vmatprep.subr.mxu0 0.0
    %592 = vmatpush1.msra.mxu0 0.0
    %593 = vmatprep.subr.mxu0 0.0
    %594 = vmatpush1.msra.mxu0 %v49
    %595 = vmatprep.subr.mxu0 0.0
    %596 = vmatpush1.msra.mxu0 %v48
    %597 = vmatprep.subr.mxu0 0.0
    %598 = vmatpush1.msra.mxu0 %v47
    %599 = vmatprep.subr.mxu0 0.0
    %600 = vmatpush1.msra.mxu0 %v46
    %601 = vmatprep.subr.mxu0 0.0
    %602 = vmatpush2.msra.mxu0 0.0
    %603 = vmatprep.subr.mxu0 0.0
    %604 = vmatpush2.msra.mxu0 0.0
    %605 = vmatprep.subr.mxu0 0.0
    %606 = vmatpush2.msra.mxu0 0.0
    %607 = vmatprep.subr.mxu0 0.0
    %608 = vmatpush2.msra.mxu0 0.0
    %609 = vmatprep.subr.mxu0 0.0
    %610 = vmatpush2.msra.mxu0 0.0
    %611 = vmatprep.subr.mxu0 0.0
    %612 = vmatpush2.msra.mxu0 0.0
    %613 = vmatprep.subr.mxu0 0.0
    %614 = vmatpush2.msra.mxu0 0.0
    %615 = vmatprep.subr.mxu0 0.0
    %616 = vmatpush2.msra.mxu0 0.0
    %617 = vmatprep.subr.mxu0 0.0
    %618 = vmatpush2.msra.mxu0 0.0
    %619 = vmatprep.subr.mxu0 0.0
    %620 = vmatpush2.msra.mxu0 0.0
    %621 = vmatprep.subr.mxu0 0.0
    %622 = vmatpush2.msra.mxu0 0.0
    %623 = vmatprep.subr.mxu0 0.0
    %624 = vmatpush2.msra.mxu0 0.0
    %625 = vmatprep.subr.mxu0 0.0
    %626 = vmatpush2.msra.mxu0 0.0
    %627 = vmatprep.subr.mxu0 0.0
    %628 = vmatpush2.msra.mxu0 0.0
    %629 = vmatprep.subr.mxu0 0.0
    %630 = vmatpush2.msra.mxu0 0.0
    %631 = vmatprep.subr.mxu0 0.0
    %632 = vmatpush2.msra.mxu0 0.0
    %633 = vmatprep.mubr.f32.mxu0 0.0
    %634 = vmatmul.mubr.f32.gmra.mxu0 %v567
    %v635 = vpop.f32.mrf.mxu0
    %v636 = vadd.f32 %v141, %v635
    %v637 = vpop.f32.mrf.mxu0
    %638 = vdwg.mxu0
    %v639 = vmul.f32 %v636, 0.5
    %v640 = vtanh.pop %v639
    %v641 = vmul.f32 %v640, 0.5
    %v642 = vadd.f32 %v641, 0.5
    %v643 = vtanh.pop %v636
    %v644 = vmul.f32 %v642, %v553
    %646 = vrot.lane.b32.xlu0 %v643, 64
    %v647 = vpop.permute.xlu0 %646
    %v649 = vmul.f32 %v642, %v647
    %651 = vrot.lane.b32.xlu0 %v649, 32
    %v652 = vpop.permute.xlu0 %651
    %v654 = vadd.f32 %v644, %v652
    %v655 = vtanh.pop %v654
    %657 = vrot.lane.b32.xlu0 %v655, 64
    %v658 = vpop.permute.xlu0 %657
    %v660 = vmul.f32 %v642, %v658
    %vm661 = vcmp.gt.s32.totalorder %v153, 4
    %v662 = vsel %vm661, 1, 0
    %vm663 = vcmp.eq.s32.totalorder %v662, 1
    %v664 = vsel %vm663, %v660, 0.0
    %666 = vrot.lane.b32.xlu0 %v660, 32
    %v667 = vpop.permute.xlu0 %666
    %v669 = vrot.slane %v141, 2
    %v671 = vsel %vm154, %v667, 0
    %673 = vmatprep.subr.mxu0 0.0
    %674 = vmatpush1.msra.mxu0 0.0
    %675 = vmatprep.subr.mxu0 0.0
    %676 = vmatpush1.msra.mxu0 0.0
    %677 = vmatprep.subr.mxu0 0.0
    %678 = vmatpush1.msra.mxu0 0.0
    %679 = vmatprep.subr.mxu0 0.0
    %680 = vmatpush1.msra.mxu0 0.0
    %681 = vmatprep.subr.mxu0 0.0
    %682 = vmatpush1.msra.mxu0 0.0
    %683 = vmatprep.subr.mxu0 0.0
    %684 = vmatpush1.msra.mxu0 0.0
    %685 = vmatprep.subr.mxu0 0.0
    %686 = vmatpush1.msra.mxu0 0.0
    %687 = vmatprep.subr.mxu0 0.0
    %688 = vmatpush1.msra.mxu0 0.0
    %689 = vmatprep.subr.mxu0 0.0
    %690 = vmatpush1.msra.mxu0 0.0
    %691 = vmatprep.subr.mxu0 0.0
    %692 = vmatpush1.msra.mxu0 0.0
    %693 = vmatprep.subr.mxu0 0.0
    %694 = vmatpush1.msra.mxu0 0.0
    %695 = vmatprep.subr.mxu0 0.0
    %696 = vmatpush1.msra.mxu0 0.0
    %697 = vmatprep.subr.mxu0 0.0
    %698 = vmatpush1.msra.mxu0 %v49
    %699 = vmatprep.subr.mxu0 0.0
    %700 = vmatpush1.msra.mxu0 %v48
    %701 = vmatprep.subr.mxu0 0.0
    %702 = vmatpush1.msra.mxu0 %v47
    %703 = vmatprep.subr.mxu0 0.0
    %704 = vmatpush1.msra.mxu0 %v46
    %705 = vmatprep.subr.mxu0 0.0
    %706 = vmatpush2.msra.mxu0 0.0
    %707 = vmatprep.subr.mxu0 0.0
    %708 = vmatpush2.msra.mxu0 0.0
    %709 = vmatprep.subr.mxu0 0.0
    %710 = vmatpush2.msra.mxu0 0.0
    %711 = vmatprep.subr.mxu0 0.0
    %712 = vmatpush2.msra.mxu0 0.0
    %713 = vmatprep.subr.mxu0 0.0
    %714 = vmatpush2.msra.mxu0 0.0
    %715 = vmatprep.subr.mxu0 0.0
    %716 = vmatpush2.msra.mxu0 0.0
    %717 = vmatprep.subr.mxu0 0.0
    %718 = vmatpush2.msra.mxu0 0.0
    %719 = vmatprep.subr.mxu0 0.0
    %720 = vmatpush2.msra.mxu0 0.0
    %721 = vmatprep.subr.mxu0 0.0
    %722 = vmatpush2.msra.mxu0 0.0
    %723 = vmatprep.subr.mxu0 0.0
    %724 = vmatpush2.msra.mxu0 0.0
    %725 = vmatprep.subr.mxu0 0.0
    %726 = vmatpush2.msra.mxu0 0.0
    %727 = vmatprep.subr.mxu0 0.0
    %728 = vmatpush2.msra.mxu0 0.0
    %729 = vmatprep.subr.mxu0 0.0
    %730 = vmatpush2.msra.mxu0 0.0
    %731 = vmatprep.subr.mxu0 0.0
    %732 = vmatpush2.msra.mxu0 0.0
    %733 = vmatprep.subr.mxu0 0.0
    %734 = vmatpush2.msra.mxu0 0.0
    %735 = vmatprep.subr.mxu0 0.0
    %736 = vmatpush2.msra.mxu0 0.0
    %737 = vmatprep.mubr.f32.mxu0 0.0
    %738 = vmatmul.mubr.f32.gmra.mxu0 %v671
    %v739 = vpop.f32.mrf.mxu0
    %v740 = vadd.f32 %v669, %v739
    %v741 = vpop.f32.mrf.mxu0
    %742 = vdwg.mxu0
    %v743 = vmul.f32 %v740, 0.5
    %v744 = vtanh.pop %v743
    %v745 = vmul.f32 %v744, 0.5
    %v746 = vadd.f32 %v745, 0.5
    %v747 = vtanh.pop %v740
    %v748 = vmul.f32 %v746, %v654
    %750 = vrot.lane.b32.xlu0 %v747, 64
    %v751 = vpop.permute.xlu0 %750
    %v753 = vmul.f32 %v746, %v751
    %755 = vrot.lane.b32.xlu0 %v753, 32
    %v756 = vpop.permute.xlu0 %755
    %v758 = vadd.f32 %v748, %v756
    %v759 = vtanh.pop %v758
    %761 = vrot.lane.b32.xlu0 %v759, 64
    %v762 = vpop.permute.xlu0 %761
    %v764 = vmul.f32 %v746, %v762
    %vm765 = vcmp.gt.s32.totalorder %v153, 5
    %v766 = vsel %vm765, 1, 0
    %vm767 = vcmp.eq.s32.totalorder %v766, 1
    %v768 = vsel %vm767, %v764, 0.0
    %770 = vrot.lane.b32.xlu0 %v764, 32
    %v771 = vpop.permute.xlu0 %770
    %v772 = vrot.slane %v141, 4
    %v774 = vsel %vm154, %v771, 0
    %776 = vmatprep.subr.mxu0 0.0
    %777 = vmatpush1.msra.mxu0 0.0
    %778 = vmatprep.subr.mxu0 0.0
    %779 = vmatpush1.msra.mxu0 0.0
    %780 = vmatprep.subr.mxu0 0.0
    %781 = vmatpush1.msra.mxu0 0.0
    %782 = vmatprep.subr.mxu0 0.0
    %783 = vmatpush1.msra.mxu0 0.0
    %784 = vmatprep.subr.mxu0 0.0
    %785 = vmatpush1.msra.mxu0 0.0
    %786 = vmatprep.subr.mxu0 0.0
    %787 = vmatpush1.msra.mxu0 0.0
    %788 = vmatprep.subr.mxu0 0.0
    %789 = vmatpush1.msra.mxu0 0.0
    %790 = vmatprep.subr.mxu0 0.0
    %791 = vmatpush1.msra.mxu0 0.0
    %792 = vmatprep.subr.mxu0 0.0
    %793 = vmatpush1.msra.mxu0 0.0
    %794 = vmatprep.subr.mxu0 0.0
    %795 = vmatpush1.msra.mxu0 0.0
    %796 = vmatprep.subr.mxu0 0.0
    %797 = vmatpush1.msra.mxu0 0.0
    %798 = vmatprep.subr.mxu0 0.0
    %799 = vmatpush1.msra.mxu0 0.0
    %800 = vmatprep.subr.mxu0 0.0
    %801 = vmatpush1.msra.mxu0 %v49
    %802 = vmatprep.subr.mxu0 0.0
    %803 = vmatpush1.msra.mxu0 %v48
    %804 = vmatprep.subr.mxu0 0.0
    %805 = vmatpush1.msra.mxu0 %v47
    %806 = vmatprep.subr.mxu0 0.0
    %807 = vmatpush1.msra.mxu0 %v46
    %808 = vmatprep.subr.mxu0 0.0
    %809 = vmatpush2.msra.mxu0 0.0
    %810 = vmatprep.subr.mxu0 0.0
    %811 = vmatpush2.msra.mxu0 0.0
    %812 = vmatprep.subr.mxu0 0.0
    %813 = vmatpush2.msra.mxu0 0.0
    %814 = vmatprep.subr.mxu0 0.0
    %815 = vmatpush2.msra.mxu0 0.0
    %816 = vmatprep.subr.mxu0 0.0
    %817 = vmatpush2.msra.mxu0 0.0
    %818 = vmatprep.subr.mxu0 0.0
    %819 = vmatpush2.msra.mxu0 0.0
    %820 = vmatprep.subr.mxu0 0.0
    %821 = vmatpush2.msra.mxu0 0.0
    %822 = vmatprep.subr.mxu0 0.0
    %823 = vmatpush2.msra.mxu0 0.0
    %824 = vmatprep.subr.mxu0 0.0
    %825 = vmatpush2.msra.mxu0 0.0
    %826 = vmatprep.subr.mxu0 0.0
    %827 = vmatpush2.msra.mxu0 0.0
    %828 = vmatprep.subr.mxu0 0.0
    %829 = vmatpush2.msra.mxu0 0.0
    %830 = vmatprep.subr.mxu0 0.0
    %831 = vmatpush2.msra.mxu0 0.0
    %832 = vmatprep.subr.mxu0 0.0
    %833 = vmatpush2.msra.mxu0 0.0
    %834 = vmatprep.subr.mxu0 0.0
    %835 = vmatpush2.msra.mxu0 0.0
    %836 = vmatprep.subr.mxu0 0.0
    %837 = vmatpush2.msra.mxu0 0.0
    %838 = vmatprep.subr.mxu0 0.0
    %839 = vmatpush2.msra.mxu0 0.0
    %840 = vmatprep.mubr.f32.mxu0 0.0
    %841 = vmatmul.mubr.f32.gmra.mxu0 %v774
    %v842 = vpop.f32.mrf.mxu0
    %v843 = vadd.f32 %v772, %v842
    %v844 = vpop.f32.mrf.mxu0
    %845 = vdwg.mxu0
    %v846 = vmul.f32 %v843, 0.5
    %v847 = vtanh.pop %v846
    %v848 = vmul.f32 %v847, 0.5
    %v849 = vadd.f32 %v848, 0.5
    %v850 = vtanh.pop %v843
    %v851 = vmul.f32 %v849, %v758
    %853 = vrot.lane.b32.xlu0 %v850, 64
    %v854 = vpop.permute.xlu0 %853
    %v856 = vmul.f32 %v849, %v854
    %858 = vrot.lane.b32.xlu0 %v856, 32
    %v859 = vpop.permute.xlu0 %858
    %v861 = vadd.f32 %v851, %v859
    %v862 = vtanh.pop %v861
    %864 = vrot.lane.b32.xlu0 %v862, 64
    %v865 = vpop.permute.xlu0 %864
    %v867 = vmul.f32 %v849, %v865
    %vm868 = vcmp.gt.s32.totalorder %v153, 6
    %v869 = vsel %vm868, 1, 0
    %vm870 = vcmp.eq.s32.totalorder %v869, 1
    %v871 = vsel %vm870, %v867, 0.0
    %873 = vrot.lane.b32.xlu0 %v867, 32
    %v874 = vpop.permute.xlu0 %873
    %v875 = vrot.slane %v141, 6
    %v877 = vsel %vm154, %v874, 0
    %879 = vmatprep.subr.mxu0 0.0
    %880 = vmatpush1.msra.mxu0 0.0
    %881 = vmatprep.subr.mxu0 0.0
    %882 = vmatpush1.msra.mxu0 0.0
    %883 = vmatprep.subr.mxu0 0.0
    %884 = vmatpush1.msra.mxu0 0.0
    %885 = vmatprep.subr.mxu0 0.0
    %886 = vmatpush1.msra.mxu0 0.0
    %887 = vmatprep.subr.mxu0 0.0
    %888 = vmatpush1.msra.mxu0 0.0
    %889 = vmatprep.subr.mxu0 0.0
    %890 = vmatpush1.msra.mxu0 0.0
    %891 = vmatprep.subr.mxu0 0.0
    %892 = vmatpush1.msra.mxu0 0.0
    %893 = vmatprep.subr.mxu0 0.0
    %894 = vmatpush1.msra.mxu0 0.0
    %895 = vmatprep.subr.mxu0 0.0
    %896 = vmatpush1.msra.mxu0 0.0
    %897 = vmatprep.subr.mxu0 0.0
    %898 = vmatpush1.msra.mxu0 0.0
    %899 = vmatprep.subr.mxu0 0.0
    %900 = vmatpush1.msra.mxu0 0.0
    %901 = vmatprep.subr.mxu0 0.0
    %902 = vmatpush1.msra.mxu0 0.0
    %903 = vmatprep.subr.mxu0 0.0
    %904 = vmatpush1.msra.mxu0 %v49
    %905 = vmatprep.subr.mxu0 0.0
    %906 = vmatpush1.msra.mxu0 %v48
    %907 = vmatprep.subr.mxu0 0.0
    %908 = vmatpush1.msra.mxu0 %v47
    %909 = vmatprep.subr.mxu0 0.0
    %910 = vmatpush1.msra.mxu0 %v46
    %911 = vmatprep.subr.mxu0 0.0
    %912 = vmatpush2.msra.mxu0 0.0
    %913 = vmatprep.subr.mxu0 0.0
    %914 = vmatpush2.msra.mxu0 0.0
    %915 = vmatprep.subr.mxu0 0.0
    %916 = vmatpush2.msra.mxu0 0.0
    %917 = vmatprep.subr.mxu0 0.0
    %918 = vmatpush2.msra.mxu0 0.0
    %919 = vmatprep.subr.mxu0 0.0
    %920 = vmatpush2.msra.mxu0 0.0
    %921 = vmatprep.subr.mxu0 0.0
    %922 = vmatpush2.msra.mxu0 0.0
    %923 = vmatprep.subr.mxu0 0.0
    %924 = vmatpush2.msra.mxu0 0.0
    %925 = vmatprep.subr.mxu0 0.0
    %926 = vmatpush2.msra.mxu0 0.0
    %927 = vmatprep.subr.mxu0 0.0
    %928 = vmatpush2.msra.mxu0 0.0
    %929 = vmatprep.subr.mxu0 0.0
    %930 = vmatpush2.msra.mxu0 0.0
    %931 = vmatprep.subr.mxu0 0.0
    %932 = vmatpush2.msra.mxu0 0.0
    %933 = vmatprep.subr.mxu0 0.0
    %934 = vmatpush2.msra.mxu0 0.0
    %935 = vmatprep.subr.mxu0 0.0
    %936 = vmatpush2.msra.mxu0 0.0
    %937 = vmatprep.subr.mxu0 0.0
    %938 = vmatpush2.msra.mxu0 0.0
    %939 = vmatprep.subr.mxu0 0.0
    %940 = vmatpush2.msra.mxu0 0.0
    %941 = vmatprep.subr.mxu0 0.0
    %942 = vmatpush2.msra.mxu0 0.0
    %943 = vmatprep.mubr.f32.mxu0 0.0
    %944 = vmatmul.mubr.f32.gmra.mxu0 %v877
    %v945 = vpop.f32.mrf.mxu0
    %v946 = vadd.f32 %v875, %v945
    %v947 = vpop.f32.mrf.mxu0
    %948 = vdwg.mxu0
    %v949 = vmul.f32 %v946, 0.5
    %v950 = vtanh.pop %v949
    %v951 = vmul.f32 %v950, 0.5
    %v952 = vadd.f32 %v951, 0.5
    %v953 = vtanh.pop %v946
    %v954 = vmul.f32 %v952, %v861
    %956 = vrot.lane.b32.xlu0 %v953, 64
    %v957 = vpop.permute.xlu0 %956
    %v959 = vmul.f32 %v952, %v957
    %961 = vrot.lane.b32.xlu0 %v959, 32
    %v962 = vpop.permute.xlu0 %961
    %v964 = vadd.f32 %v954, %v962
    %v965 = vtanh.pop %v964
    %967 = vrot.lane.b32.xlu0 %v965, 64
    %v968 = vpop.permute.xlu0 %967
    %v970 = vmul.f32 %v952, %v968
    %vm971 = vcmp.gt.s32.totalorder %v153, 7
    %v972 = vsel %vm971, 1, 0
    %vm973 = vcmp.eq.s32.totalorder %v972, 1
    %v974 = vsel %vm973, %v970, 0.0
    %v976 = vlaneseq
    %v977 = vshrl.u32 %v976, 7
    %v978 = vsub.s32 0, %v977
    %v979 = vrot.slane %v50, %v978
    %980 = vrot.lane.b32.xlu0 %v979, 96
    %v981 = vpop.permute.xlu0 %980
    %v983 = vmul.f32 %v253, %v981
    %985 = vrot.lane.b32.xlu0 %v983, 32
    %v986 = vpop.permute.xlu0 %985
    %vm988 = vcmask 254976
    %v989 = vsel %vm988, %v986, 0.0
    %990 = vadd.xlane.f32.xlu0 %v989
    %v991 = vpop.xlane.xlu0 %990
    %v992 = vmul.f32 %v357, %v981
    %994 = vrot.lane.b32.xlu0 %v992, 32
    %v995 = vpop.permute.xlu0 %994
    %v997 = vsel %vm988, %v995, 0.0
    %998 = vadd.xlane.f32.xlu0 %v997
    %v999 = vpop.xlane.xlu0 %998
    %v1000 = vmul.f32 %v460, %v981
    %1002 = vrot.lane.b32.xlu0 %v1000, 32
    %v1003 = vpop.permute.xlu0 %1002
    %v1005 = vsel %vm988, %v1003, 0.0
    %1006 = vadd.xlane.f32.xlu0 %v1005
    %v1007 = vpop.xlane.xlu0 %1006
    %v1008 = vmul.f32 %v563, %v981
    %1010 = vrot.lane.b32.xlu0 %v1008, 32
    %v1011 = vpop.permute.xlu0 %1010
    %v1013 = vsel %vm988, %v1011, 0.0
    %1014 = vadd.xlane.f32.xlu0 %v1013
    %v1015 = vpop.xlane.xlu0 %1014
    %v1016 = vmul.f32 %v664, %v981
    %1018 = vrot.lane.b32.xlu0 %v1016, 32
    %v1019 = vpop.permute.xlu0 %1018
    %v1021 = vsel %vm988, %v1019, 0.0
    %1022 = vadd.xlane.f32.xlu0 %v1021
    %v1023 = vpop.xlane.xlu0 %1022
    %v1024 = vmul.f32 %v768, %v981
    %1026 = vrot.lane.b32.xlu0 %v1024, 32
    %v1027 = vpop.permute.xlu0 %1026
    %v1029 = vsel %vm988, %v1027, 0.0
    %1030 = vadd.xlane.f32.xlu0 %v1029
    %v1031 = vpop.xlane.xlu0 %1030
    %v1032 = vmul.f32 %v871, %v981
    %1034 = vrot.lane.b32.xlu0 %v1032, 32
    %v1035 = vpop.permute.xlu0 %1034
    %v1037 = vsel %vm988, %v1035, 0.0
    %1038 = vadd.xlane.f32.xlu0 %v1037
    %v1039 = vpop.xlane.xlu0 %1038
    %v1040 = vmul.f32 %v974, %v981
    %1042 = vrot.lane.b32.xlu0 %v1040, 32
    %v1043 = vpop.permute.xlu0 %1042
    %v1045 = vsel %vm988, %v1043, 0.0
    %1046 = vadd.xlane.f32.xlu0 %v1045
    %v1047 = vpop.xlane.xlu0 %1046
    %v1049 = vrot.slane %v999, 6
    %v1052 = vrot.slane %v1007, 4
    %v1055 = vrot.slane %v1015, 2
    %v1058 = vrot.slane %v1031, 6
    %v1061 = vrot.slane %v1039, 4
    %v1064 = vrot.slane %v1047, 2
    %vm1066 = vcmask 1041408
    %v1067 = vsel %vm1066, %v991, %v1049
    %vm1068 = vcmask 1043456
    %v1069 = vsel %vm1068, %v1067, %v1052
    %vm1070 = vcmask 1045504
    %v1071 = vsel %vm1070, %v1069, %v1055
    %v1072 = vsel %vm1066, %v1023, %v1058
    %v1073 = vsel %vm1068, %v1072, %v1061
    %v1074 = vsel %vm1070, %v1073, %v1064
    %vm1075 = vcmask 7168
    %v1076 = vsel %vm1075, %v1071, -inf
    %1077 = vmax.xlane.f32.xlu0 %v1076
    %v1078 = vpop.xlane.xlu0 %1077
    %v1079 = vrot.slane %v1078, 4
    %v1080 = vmax.f32 %v1078, %v1079
    %v1081 = vrot.slane %v1080, 2
    %v1082 = vmax.f32 %v1080, %v1081
    %v1083 = vrot.slane %v1082, 1
    %v1084 = vmax.f32 %v1082, %v1083
    %s1085 = vtos %v1084
    %v1086 = vstv %s1085
    %v1087 = vsub.f32 %v1071, %v1086
    %v1088 = vmul.f32 %v1087, 1.442695
    %v1089 = vpow.pop %v1088
    %v1090 = vsel %vm1075, %v1089, 0.0
    %1091 = vadd.xlane.f32.xlu0 %v1090
    %v1092 = vpop.xlane.xlu0 %1091
    %v1093 = vrot.slane %v1092, 4
    %v1094 = vadd.f32 %v1092, %v1093
    %v1095 = vrot.slane %v1094, 2
    %v1096 = vadd.f32 %v1094, %v1095
    %v1097 = vrot.slane %v1096, 1
    %v1098 = vadd.f32 %v1096, %v1097
    %s1099 = vtos %v1098
    %v1100 = vstv %s1099
    %v1101 = vrcp.pop %v1100
    %v1102 = vmul.f32 %v1089, %v1101
    %v1103 = vsel %vm1075, %v1074, -inf
    %1104 = vmax.xlane.f32.xlu0 %v1103
    %v1105 = vpop.xlane.xlu0 %1104
    %v1106 = vrot.slane %v1105, 4
    %v1107 = vmax.f32 %v1105, %v1106
    %v1108 = vrot.slane %v1107, 2
    %v1109 = vmax.f32 %v1107, %v1108
    %v1110 = vrot.slane %v1109, 1
    %v1111 = vmax.f32 %v1109, %v1110
    %s1112 = vtos %v1111
    %v1113 = vstv %s1112
    %v1114 = vsub.f32 %v1074, %v1113
    %v1115 = vmul.f32 %v1114, 1.442695
    %v1116 = vpow.pop %v1115
    %v1117 = vsel %vm1075, %v1116, 0.0
    %1118 = vadd.xlane.f32.xlu0 %v1117
    %v1119 = vpop.xlane.xlu0 %1118
    %v1120 = vrot.slane %v1119, 4
    %v1121 = vadd.f32 %v1119, %v1120
    %v1122 = vrot.slane %v1121, 2
    %v1123 = vadd.f32 %v1121, %v1122
    %v1124 = vrot.slane %v1123, 1
    %v1125 = vadd.f32 %v1123, %v1124
    %s1126 = vtos %v1125
    %v1127 = vstv %s1126
    %v1128 = vrcp.pop %v1127
    %v1129 = vmul.f32 %v1116, %v1128
    %1131 = vset.pattern.permute.xlu0 0
    %1132 = vperm.xlu0 %1131, %v1102
    %v1133 = vpop.permute.xlu0 %1132
    %v1135 = vmul.f32 %v1133, %v253
    %v1136 = vadd.f32 %v1135, 0.0
    %v1138 = vrot.slane %v357, 7
    %1139 = vrot.lane.b32.xlu0 %v1138, 32
    %v1140 = vpop.permute.xlu0 %1139
    %v1142 = vmul.f32 %v1133, %v1140
    %v1144 = vrot.slane %v1142, 1
    %1145 = vrot.lane.b32.xlu0 %v1144, 96
    %v1146 = vpop.permute.xlu0 %1145
    %v1148 = vadd.f32 %v1136, %v1146
    %v1150 = vrot.slane %v460, 6
    %1151 = vrot.lane.b32.xlu0 %v1150, 32
    %v1152 = vpop.permute.xlu0 %1151
    %v1154 = vmul.f32 %v1133, %v1152
    %v1156 = vrot.slane %v1154, 2
    %1157 = vrot.lane.b32.xlu0 %v1156, 96
    %v1158 = vpop.permute.xlu0 %1157
    %v1160 = vadd.f32 %v1148, %v1158
    %v1162 = vrot.slane %v563, 5
    %1163 = vrot.lane.b32.xlu0 %v1162, 32
    %v1164 = vpop.permute.xlu0 %1163
    %v1166 = vmul.f32 %v1133, %v1164
    %v1168 = vrot.slane %v1166, 3
    %1169 = vrot.lane.b32.xlu0 %v1168, 96
    %v1170 = vpop.permute.xlu0 %1169
    %v1172 = vadd.f32 %v1160, %v1170
    %v1174 = vrot.slane %v664, 4
    %1175 = vrot.lane.b32.xlu0 %v1174, 32
    %v1176 = vpop.permute.xlu0 %1175
    %v1178 = vmul.f32 %v1133, %v1176
    %v1180 = vrot.slane %v1178, 4
    %1181 = vrot.lane.b32.xlu0 %v1180, 96
    %v1182 = vpop.permute.xlu0 %1181
    %v1184 = vadd.f32 %v1172, %v1182
    %v1186 = vrot.slane %v768, 3
    %1187 = vrot.lane.b32.xlu0 %v1186, 32
    %v1188 = vpop.permute.xlu0 %1187
    %v1190 = vmul.f32 %v1133, %v1188
    %v1192 = vrot.slane %v1190, 5
    %1193 = vrot.lane.b32.xlu0 %v1192, 96
    %v1194 = vpop.permute.xlu0 %1193
    %v1196 = vadd.f32 %v1184, %v1194
    %v1198 = vrot.slane %v871, 2
    %1199 = vrot.lane.b32.xlu0 %v1198, 32
    %v1200 = vpop.permute.xlu0 %1199
    %v1202 = vmul.f32 %v1133, %v1200
    %v1204 = vrot.slane %v1202, 6
    %1205 = vrot.lane.b32.xlu0 %v1204, 96
    %v1206 = vpop.permute.xlu0 %1205
    %v1208 = vadd.f32 %v1196, %v1206
    %v1210 = vrot.slane %v974, 1
    %1211 = vrot.lane.b32.xlu0 %v1210, 32
    %v1212 = vpop.permute.xlu0 %1211
    %v1214 = vmul.f32 %v1133, %v1212
    %v1216 = vrot.slane %v1214, 7
    %1217 = vrot.lane.b32.xlu0 %v1216, 96
    %v1218 = vpop.permute.xlu0 %1217
    %v1220 = vadd.f32 %v1208, %v1218
    %1222 = vset.pattern.permute.xlu0 0
    %1223 = vperm.xlu0 %1222, %v1129
    %v1224 = vpop.permute.xlu0 %1223
    %v1227 = vrot.slane %v253, 1
    %1228 = vrot.lane.b32.xlu0 %v1227, 32
    %v1229 = vpop.permute.xlu0 %1228
    %v1231 = vmul.f32 %v1224, %v1229
    %v1232 = vadd.f32 %v1231, 0.0
    %v1233 = vmul.f32 %v1224, %v357
    %v1235 = vrot.slane %v1233, 1
    %1236 = vrot.lane.b32.xlu0 %v1235, 32
    %v1237 = vpop.permute.xlu0 %1236
    %v1239 = vadd.f32 %v1232, %v1237
    %v1240 = vrot.slane %v460, 7
    %1241 = vrot.lane.b32.xlu0 %v1240, 32
    %v1242 = vpop.permute.xlu0 %1241
    %v1244 = vmul.f32 %v1224, %v1242
    %v1246 = vrot.slane %v1244, 2
    %v1248 = vadd.f32 %v1239, %v1246
    %v1249 = vrot.slane %v563, 6
    %1250 = vrot.lane.b32.xlu0 %v1249, 32
    %v1251 = vpop.permute.xlu0 %1250
    %v1253 = vmul.f32 %v1224, %v1251
    %v1255 = vrot.slane %v1253, 3
    %v1257 = vadd.f32 %v1248, %v1255
    %v1258 = vrot.slane %v664, 5
    %1259 = vrot.lane.b32.xlu0 %v1258, 32
    %v1260 = vpop.permute.xlu0 %1259
    %v1262 = vmul.f32 %v1224, %v1260
    %v1264 = vrot.slane %v1262, 4
    %v1266 = vadd.f32 %v1257, %v1264
    %v1267 = vrot.slane %v768, 4
    %1268 = vrot.lane.b32.xlu0 %v1267, 32
    %v1269 = vpop.permute.xlu0 %1268
    %v1271 = vmul.f32 %v1224, %v1269
    %v1273 = vrot.slane %v1271, 5
    %v1275 = vadd.f32 %v1266, %v1273
    %v1276 = vrot.slane %v871, 3
    %1277 = vrot.lane.b32.xlu0 %v1276, 32
    %v1278 = vpop.permute.xlu0 %1277
    %v1280 = vmul.f32 %v1224, %v1278
    %v1282 = vrot.slane %v1280, 6
    %v1284 = vadd.f32 %v1275, %v1282
    %v1285 = vrot.slane %v974, 2
    %1286 = vrot.lane.b32.xlu0 %v1285, 32
    %v1287 = vpop.permute.xlu0 %1286
    %v1289 = vmul.f32 %v1224, %v1287
    %v1291 = vrot.slane %v1289, 7
    %v1293 = vadd.f32 %v1284, %v1291
    %v1295 = vrot.slane %v1293, 7
    %1296 = vrot.lane.b32.xlu0 %v1295, 96
    %v1297 = vpop.permute.xlu0 %1296
    %vm1299 = vcmask 1040384
    %v1300 = vsel %vm1299, %v1220, %v1297
    %1302 = vrot.lane.b32.xlu0 %v1300, 32
    %v1303 = vpop.permute.xlu0 %1302
    %1305 = vst.msk [vmem:[#allocation6] sm:$0x3] %vm988, %v1303
    %v1306 = vld [vmem:[%s6] sm:$0xff]
    %v1307 = vld [vmem:[%s6 + $0x8] sm:$0xff]
    %v1308 = vld [vmem:[%s6 + $0x10] sm:$0xff]
    %v1309 = vld [vmem:[%s6 + $0x18] sm:$0xff]
    %v1310 = vld [vmem:[%s7] sm:$0x1]
    %v1312 = vlaneseq
    %v1313 = vshrl.u32 %v1312, 7
    %v1314 = vsub.s32 0, %v1313
    %v1315 = vrot.slane %v1310, %v1314
    %v1317 = vsel %vm154, %v1303, 0
    %1319 = vmatprep.subr.mxu0 0.0
    %1320 = vmatpush1.msra.mxu0 0.0
    %1321 = vmatprep.subr.mxu0 0.0
    %1322 = vmatpush1.msra.mxu0 0.0
    %1323 = vmatprep.subr.mxu0 0.0
    %1324 = vmatpush1.msra.mxu0 0.0
    %1325 = vmatprep.subr.mxu0 0.0
    %1326 = vmatpush1.msra.mxu0 0.0
    %1327 = vmatprep.subr.mxu0 0.0
    %1328 = vmatpush1.msra.mxu0 0.0
    %1329 = vmatprep.subr.mxu0 0.0
    %1330 = vmatpush1.msra.mxu0 0.0
    %1331 = vmatprep.subr.mxu0 0.0
    %1332 = vmatpush1.msra.mxu0 0.0
    %1333 = vmatprep.subr.mxu0 0.0
    %1334 = vmatpush1.msra.mxu0 0.0
    %1335 = vmatprep.subr.mxu0 0.0
    %1336 = vmatpush1.msra.mxu0 0.0
    %1337 = vmatprep.subr.mxu0 0.0
    %1338 = vmatpush1.msra.mxu0 0.0
    %1339 = vmatprep.subr.mxu0 0.0
    %1340 = vmatpush1.msra.mxu0 0.0
    %1341 = vmatprep.subr.mxu0 0.0
    %1342 = vmatpush1.msra.mxu0 0.0
    %1343 = vmatprep.subr.mxu0 0.0
    %1344 = vmatpush1.msra.mxu0 %v1309
    %1345 = vmatprep.subr.mxu0 0.0
    %1346 = vmatpush1.msra.mxu0 %v1308
    %1347 = vmatprep.subr.mxu0 0.0
    %1348 = vmatpush1.msra.mxu0 %v1307
    %1349 = vmatprep.subr.mxu0 0.0
    %1350 = vmatpush1.msra.mxu0 %v1306
    %1351 = vmatprep.subr.mxu0 0.0
    %1352 = vmatpush2.msra.mxu0 0.0
    %1353 = vmatprep.subr.mxu0 0.0
    %1354 = vmatpush2.msra.mxu0 0.0
    %1355 = vmatprep.subr.mxu0 0.0
    %1356 = vmatpush2.msra.mxu0 0.0
    %1357 = vmatprep.subr.mxu0 0.0
    %1358 = vmatpush2.msra.mxu0 0.0
    %1359 = vmatprep.subr.mxu0 0.0
    %1360 = vmatpush2.msra.mxu0 0.0
    %1361 = vmatprep.subr.mxu0 0.0
    %1362 = vmatpush2.msra.mxu0 0.0
    %1363 = vmatprep.subr.mxu0 0.0
    %1364 = vmatpush2.msra.mxu0 0.0
    %1365 = vmatprep.subr.mxu0 0.0
    %1366 = vmatpush2.msra.mxu0 0.0
    %1367 = vmatprep.subr.mxu0 0.0
    %1368 = vmatpush2.msra.mxu0 0.0
    %1369 = vmatprep.subr.mxu0 0.0
    %1370 = vmatpush2.msra.mxu0 0.0
    %1371 = vmatprep.subr.mxu0 0.0
    %1372 = vmatpush2.msra.mxu0 0.0
    %1373 = vmatprep.subr.mxu0 0.0
    %1374 = vmatpush2.msra.mxu0 0.0
    %1375 = vmatprep.subr.mxu0 0.0
    %1376 = vmatpush2.msra.mxu0 0.0
    %1377 = vmatprep.subr.mxu0 0.0
    %1378 = vmatpush2.msra.mxu0 0.0
    %1379 = vmatprep.subr.mxu0 0.0
    %1380 = vmatpush2.msra.mxu0 0.0
    %1381 = vmatprep.subr.mxu0 0.0
    %1382 = vmatpush2.msra.mxu0 0.0
    %1383 = vmatprep.mubr.f32.mxu0 0.0
    %1384 = vmatmul.mubr.f32.gmra.mxu0 %v1317
    %v1385 = vpop.f32.mrf.mxu0
    %v1386 = vadd.f32 %v1315, %v1385
    %v1387 = vpop.f32.mrf.mxu0
    %1388 = vdwg.mxu0
    %vm1389 = vcmask 25600
    %1390 = vst.msk [vmem:[#allocation5] sm:$0x3] %vm1389, %v1386
    // Predicated region
    $region38: #{rnn_attention_forward.1} parent=1 // pred_check
      _
    $region39: #{rnn_attention_forward.1} parent=1 // pred_check_branch
      %1392 = sbr.rel (0) target = $region41
    $region40: #{rnn_attention_forward.1} parent=1 // pred_region
      %s1394 = ssub.s32 32, 32
      %1395 = vsyncadd [#allocation3], %s1394
      %s1397 = sshll.u32 [#allocation5], 4
      %s1398 = int_to_ptr.vmem [resolvable:$true] %s1397
      %1400 = dma.vmem_to_hbm [thread:$0]  %s1398, 32, %s8, [#allocation3]
    $region41: #{rnn_attention_forward.1} parent=1 // pred_fallthru
      _
    // Predicated region
    $region42: #{rnn_attention_forward.1} parent=1 // pred_check
      _
    $region43: #{rnn_attention_forward.1} parent=1 // pred_check_branch
      %1402 = sbr.rel (0) target = $region45
    $region44: #{rnn_attention_forward.1} parent=1 // pred_region
      %s1404 = ssub.s32 32, 32
      %1405 = vsyncadd [#allocation7], %s1404
      %s1407 = sshll.u32 [#allocation6], 4
      %s1408 = int_to_ptr.vmem [resolvable:$true] %s1407
      %1410 = dma.vmem_to_hbm [thread:$0]  %s1408, 32, %s9, [#allocation7]
    $region45: #{rnn_attention_forward.1} parent=1 // pred_fallthru
      _
    // Predicated region
    $region46: #{rnn_attention_forward.1} parent=1 // pred_check
      _
    $region47: #{rnn_attention_forward.1} parent=1 // pred_check_branch
      %1412 = sbr.rel (0) target = $region49
    $region48: #{rnn_attention_forward.1} parent=1 // pred_region
      %1413 = dma.done [#allocation3], 32
    $region49: #{rnn_attention_forward.1} parent=1 // pred_fallthru
      _
    // Predicated region
    $region50: #{rnn_attention_forward.1} parent=1 // pred_check
      _
    $region51: #{rnn_attention_forward.1} parent=1 // pred_check_branch
      %1415 = sbr.rel (0) target = $region53
    $region52: #{rnn_attention_forward.1} parent=1 // pred_region
      %1416 = dma.done [#allocation7], 32
    $region53: #{rnn_attention_forward.1} parent=1 // pred_fallthru
      _
    %1417 = vsyncpa [#allocation3], 1
    %1418 = vsyncpa [#allocation7], 1
    %1419 = vsyncpa [#allocation4], 1

</llo_original>
